<compile_context>
chip_gen: v7x
topology: tpu7x:2x2x1
jax: 0.10.0
libtpu: 0.0.40
codegen_flags: <defaults>
</compile_context>

<pallas_src>
import math

import jax
import jax.numpy as jnp
from jax.experimental import pallas as pl
from jax.experimental.pallas import tpu as pltpu


def dialogue_rnn_cell_kernel(
    u_ref, qmask_ref, onehot_ref, ghist_ref, q0s_ref, e0_ref,
    w_att_ref,
    g_wih_ref, g_whh_ref, g_bi_ref, g_bhn_ref,
    p_wih_ref, p_whh_ref, p_bi_ref, p_bhn_ref,
    e_wih_ref, e_whh_ref, e_bi_ref, e_bhn_ref,
    g_out_ref, q_out_ref, e_out_ref, alpha_out_ref,
):
    U = u_ref[...]                      # (bb, D_m)
    qmask = qmask_ref[...]              # (bb, P)
    onehot = onehot_ref[...]            # (bb, P) one-hot of argmax(qmask)
    ghist = ghist_ref[...]              # (bb, T, D_g) batch-major history
    e0v = e0_ref[...]                   # (bb, D_e)

    P, bb, Dp = q0s_ref.shape
    T = ghist.shape[1]

    def dot(a, b):
        # bf16 (or f32) MXU operands, f32 accumulation.
        return jnp.dot(a.astype(b.dtype), b, preferred_element_type=jnp.float32)

    def gru(gi, gh, bhn, h):
        # PyTorch GRUCell, gates [r | z | n]; r/z biases pre-folded into gi.
        H = h.shape[-1]
        r = jax.nn.sigmoid(gi[:, 0:H] + gh[:, 0:H])
        z = jax.nn.sigmoid(gi[:, H:2 * H] + gh[:, H:2 * H])
        n = jnp.tanh(gi[:, 2 * H:] + r * (gh[:, 2 * H:] + bhn))
        return (1.0 - z) * n + z * h

    # Party views and sublane-stacked (party-major) operand.
    q0_parties = [q0s_ref[p] for p in range(P)]             # P x (bb, Dp)
    q0_stacked = jnp.concatenate(q0_parties, axis=0)         # (P*bb, Dp)

    # ---- speaker-party selection: q0_sel[b] = q0[b, argmax(qmask[b]), :] ----
    q0_sel = q0_parties[0] * onehot[:, 0:1]
    for p in range(1, P):
        q0_sel = q0_sel + q0_parties[p] * onehot[:, p:p + 1]

    # ---- global GRU cell: g_ = GRU([U ; q0_sel], g_hist[-1]) ----------------
    g_prev = ghist[:, T - 1, :]                              # zeros if no history
    x_g = jnp.concatenate([U, q0_sel], axis=1)               # single K=D_m+D_p dot
    gi_g = dot(x_g, g_wih_ref[...]) + g_bi_ref[...]
    gh_g = dot(g_prev, g_whh_ref[...])
    g_ = gru(gi_g, gh_g, g_bhn_ref[...], g_prev)
    g_out_ref[...] = g_                                      # dropout: eval identity

    # ---- SimpleAttention over g_hist (softmax over time) --------------------
    scale = jnp.sum(ghist * w_att_ref[...], axis=2)          # (bb, T)
    mx = jnp.max(scale, axis=1, keepdims=True)
    ex = jnp.exp(scale - mx)
    alpha = ex * pl.reciprocal(jnp.sum(ex, axis=1, keepdims=True), approx=True)
    alpha_out_ref[...] = alpha
    c_ = jnp.sum(alpha[:, :, None] * ghist, axis=1)          # (bb, D_g)

    # ---- party GRU cell: both parties in one MXU push ------------------------
    x_p = jnp.concatenate([U, c_], axis=1)                   # (bb, D_m+D_g)
    gi_p = dot(x_p, p_wih_ref[...]) + p_bi_ref[...]          # (bb, 3*Dp)
    gi_ps = jnp.concatenate([gi_p] * P, axis=0)              # (P*bb, 3*Dp)
    gh_ps = dot(q0_stacked, p_whh_ref[...])                  # one dot for all parties
    qs_stacked = gru(gi_ps, gh_ps, p_bhn_ref[...], q0_stacked)   # dropout: identity

    mk = jnp.concatenate([qmask[:, p:p + 1] for p in range(P)], axis=0)   # (P*bb, 1)
    q_blend = q0_stacked * (1.0 - mk) + qs_stacked * mk      # listener_state=False
    q_out_ref[...] = q_blend.reshape(P, bb, Dp)              # single store

    # ---- selected q for emotion cell -----------------------------------------
    q_sel = q_blend[0:bb] * onehot[:, 0:1]
    for p in range(1, P):
        q_sel = q_sel + q_blend[p * bb:(p + 1) * bb] * onehot[:, p:p + 1]

    # ---- emotion GRU cell -----------------------------------------------------
    gi_e = dot(q_sel, e_wih_ref[...]) + e_bi_ref[...]
    gh_e = dot(e0v, e_whh_ref[...])
    e_out_ref[...] = gru(gi_e, gh_e, e_bhn_ref[...], e0v)    # dropout: eval identity


def dialogue_rnn_cell_forward(U, qmask, g_hist, q0, e0, params, *,
                              block_b=None, matmul_dtype=jnp.bfloat16):
    B, D_m = U.shape
    P = qmask.shape[1]
    D_p = q0.shape[2]
    D_g = params["g_cell"]["w_hh"].shape[1]
    D_e = params["e_cell"]["w_hh"].shape[1]

    # --- index glue: speaker one-hot from argmax(qmask) ---
    qm_idx = jnp.argmax(qmask, axis=1)
    onehot = jax.nn.one_hot(qm_idx, P, dtype=jnp.float32)

    # --- empty-history / empty-e0 handling (static, shape-based) ---
    has_hist = g_hist.shape[0] > 0
    if has_hist:
        ghist_bt = jnp.transpose(g_hist.astype(jnp.float32), (1, 0, 2))   # (B,T,D_g)
    else:
        ghist_bt = jnp.zeros((B, 1, D_g), jnp.float32)   # g_prev=0, c_=0, alpha dropped
    T = ghist_bt.shape[1]
    e0_in = e0.astype(jnp.float32) if e0.shape[0] > 0 else jnp.zeros((B, D_e), jnp.float32)

    # --- GRU weights: torch layout -> x @ W form; fold r/z biases ---
    def prep_gru(cell):
        H = cell["w_hh"].shape[1]
        w_ih = cell["w_ih"].T.astype(matmul_dtype)           # (in_dim, 3H)
        w_hh = cell["w_hh"].T.astype(matmul_dtype)           # (H, 3H)
        b_ih = cell["b_ih"].astype(jnp.float32)
        b_hh = cell["b_hh"].astype(jnp.float32)
        b_i = jnp.concatenate([b_ih[:2 * H] + b_hh[:2 * H], b_ih[2 * H:]])[None, :]
        b_hn = b_hh[2 * H:][None, :]
        return w_ih, w_hh, b_i, b_hn

    g_wih, g_whh, g_bi, g_bhn = prep_gru(params["g_cell"])
    p_wih, p_whh, p_bi, p_bhn = prep_gru(params["p_cell"])
    e_wih, e_whh, e_bi, e_bhn = prep_gru(params["e_cell"])
    w_att = params["att_w"].astype(jnp.float32)              # (1, D_g)

    q0_pm = jnp.transpose(q0.astype(jnp.float32), (1, 0, 2))  # (P, B, D_p) party-major

    # --- grid: single step by default (weights loaded once, all MXU rows).
    #     On v7x, pass block_b=B//2 to split the batch across both TensorCores.
    if block_b is None:
        block_b = B
    assert B % block_b == 0, "batch must be divisible by the batch tile"
    assert block_b == B or block_b % 8 == 0, "sub-batch tiles must be multiples of 8"
    bb = block_b
    grid = (B // bb,)
    sem = ("arbitrary",) if grid[0] == 1 else ("parallel",)

    b_map = lambda i: (i, 0)
    b_map3 = lambda i: (i, 0, 0)
    pm_map = lambda i: (0, i, 0)
    w_map = lambda i: (0, 0)

    data_arrays = [U.astype(jnp.float32), qmask.astype(jnp.float32), onehot,
                   ghist_bt, q0_pm, e0_in]
    data_specs = [
        pl.BlockSpec((bb, D_m), b_map),          # U
        pl.BlockSpec((bb, P), b_map),            # qmask
        pl.BlockSpec((bb, P), b_map),            # onehot
        pl.BlockSpec((bb, T, D_g), b_map3),      # g_hist (batch-major)
        pl.BlockSpec((P, bb, D_p), pm_map),      # q0 party-major
        pl.BlockSpec((bb, D_e), b_map),          # e0
    ]
    param_arrays = [w_att,
                    g_wih, g_whh, g_bi, g_bhn,
                    p_wih, p_whh, p_bi, p_bhn,
                    e_wih, e_whh, e_bi, e_bhn]
    param_specs = [pl.BlockSpec(a.shape, w_map) for a in param_arrays]

    out_shape = (
        jax.ShapeDtypeStruct((B, D_g), jnp.float32),
        jax.ShapeDtypeStruct((P, B, D_p), jnp.float32),
        jax.ShapeDtypeStruct((B, D_e), jnp.float32),
        jax.ShapeDtypeStruct((B, T), jnp.float32),
    )
    out_specs = (
        pl.BlockSpec((bb, D_g), b_map),
        pl.BlockSpec((P, bb, D_p), pm_map),
        pl.BlockSpec((bb, D_e), b_map),
        pl.BlockSpec((bb, T), b_map),
    )

    g_, q_pm, e_, alpha_bt = pl.pallas_call(
        dialogue_rnn_cell_kernel,
        grid=grid,
        in_specs=data_specs + param_specs,
        out_specs=out_specs,
        out_shape=out_shape,
        compiler_params=pltpu.CompilerParams(dimension_semantics=sem),
    )(*data_arrays, *param_arrays)

    q_ = jnp.transpose(q_pm, (1, 0, 2))                        # (B, P, D_p)
    alpha = alpha_bt[:, None, :] if has_hist else None         # (B, 1, T) like torch
    return g_, q_, e_, alpha


# ----------------------------- parameters & reference -----------------------------

def init_params(key, D_m, D_g, D_p, D_e):
    def gru_params(k, in_dim, hid):
        ks = jax.random.split(k, 4)
        bound = 1.0 / math.sqrt(hid)
        u = lambda kk, shape: jax.random.uniform(kk, shape, jnp.float32, -bound, bound)
        return dict(w_ih=u(ks[0], (3 * hid, in_dim)), w_hh=u(ks[1], (3 * hid, hid)),
                    b_ih=u(ks[2], (3 * hid,)), b_hh=u(ks[3], (3 * hid,)))
    k1, k2, k3, k4 = jax.random.split(key, 4)
    return dict(
        g_cell=gru_params(k1, D_m + D_p, D_g),
        p_cell=gru_params(k2, D_m + D_g, D_p),
        e_cell=gru_params(k3, D_p, D_e),
        att_w=jax.random.uniform(k4, (1, D_g), jnp.float32, -0.3, 0.3),
    )


def _gru_ref(x, h, w_ih, w_hh, b_ih, b_hh):
    gi = x @ w_ih.T + b_ih
    gh = h @ w_hh.T + b_hh
    H = h.shape[-1]
    r = jax.nn.sigmoid(gi[:, :H] + gh[:, :H])
    z = jax.nn.sigmoid(gi[:, H:2 * H] + gh[:, H:2 * H])
    n = jnp.tanh(gi[:, 2 * H:] + r * gh[:, 2 * H:])
    return (1.0 - z) * n + z * h


def reference(U, qmask, g_hist, q0, e0, params):
    """Pure-JAX port of DialogueRNNCell.forward (eval mode, listener_state=False)."""
    B, D_m = U.shape
    P = qmask.shape[1]
    D_p = q0.shape[2]
    D_g = params["g_cell"]["w_hh"].shape[1]
    D_e = params["e_cell"]["w_hh"].shape[1]
    gc, pc, ec = params["g_cell"], params["p_cell"], params["e_cell"]

    qm_idx = jnp.argmax(qmask, axis=1)
    q0_sel = q0[jnp.arange(B), qm_idx]
    g_prev = g_hist[-1] if g_hist.shape[0] > 0 else jnp.zeros((B, D_g), U.dtype)
    g_ = _gru_ref(jnp.concatenate([U, q0_sel], axis=1), g_prev,
                  gc["w_ih"], gc["w_hh"], gc["b_ih"], gc["b_hh"])
    if g_hist.shape[0] > 0:
        scale = jnp.einsum('tbd,od->tbo', g_hist, params["att_w"])   # (T,B,1)
        alpha = jax.nn.softmax(scale, axis=0)
        alpha = jnp.transpose(alpha, (1, 2, 0))                       # (B,1,T)
        c_ = jnp.matmul(alpha, jnp.transpose(g_hist, (1, 0, 2)))[:, 0, :]
    else:
        c_, alpha = jnp.zeros((B, D_g), U.dtype), None
    U_c = jnp.concatenate([U, c_], axis=1)
    U_c_exp = jnp.broadcast_to(U_c[:, None, :], (B, P, D_m + D_g)).reshape(B * P, -1)
    qs_ = _gru_ref(U_c_exp, q0.reshape(B * P, D_p),
                   pc["w_ih"], pc["w_hh"], pc["b_ih"], pc["b_hh"]).reshape(B, P, D_p)
    ql_ = q0                                      # listener_state=False
    qm = qmask[:, :, None]
    q_ = ql_ * (1.0 - qm) + qs_ * qm
    e0v = e0 if e0.shape[0] > 0 else jnp.zeros((B, D_e), U.dtype)
    q_sel = q_[jnp.arange(B), qm_idx]
    e_ = _gru_ref(q_sel, e0v, ec["w_ih"], ec["w_hh"], ec["b_ih"], ec["b_hh"])
    return g_, q_, e_, alpha


if __name__ == "__main__":
    key = jax.random.PRNGKey(0)
    B, P, T = 16, 2, 8
    D_m = D_g = D_p = D_e = 32
    kU, kq, kg, kq0, ke0, kp = jax.random.split(key, 6)

    U = jax.random.normal(kU, (B, D_m), jnp.float32)
    speaker = jax.random.randint(kq, (B,), 0, P)
    qmask = jax.nn.one_hot(speaker, P, dtype=jnp.float32)
    g_hist = jax.random.normal(kg, (T, B, D_g), jnp.float32)
    q0 = jax.random.normal(kq0, (B, P, D_p), jnp.float32)
    e0 = jax.random.normal(ke0, (B, D_e), jnp.float32)
    params = init_params(kp, D_m, D_g, D_p, D_e)

    g_, q_, e_, alpha = dialogue_rnn_cell_forward(U, qmask, g_hist, q0, e0, params)
    g_, q_, e_, alpha = jax.block_until_ready((g_, q_, e_, alpha))

    rg, rq, re, ralpha = reference(U, qmask, g_hist, q0, e0, params)

    assert g_.shape == (B, D_g) and q_.shape == (B, P, D_p) and e_.shape == (B, D_e)
    assert alpha is not None and alpha.shape == (B, 1, T)
    # bf16 MXU operands + approx reciprocal -> looser tolerance than pure f32.
    for got, want in ((g_, rg), (q_, rq), (e_, re), (alpha, ralpha)):
        err = float(jnp.abs(got - want).max())
        assert jnp.allclose(got, want, rtol=2e-2, atol=2e-2), err
    print("KERNEL_OK")
</pallas_src>

<mosaic_0001>
module attributes {stable_mosaic.version = 11 : i64} {
  func.func @dialogue_rnn_cell_kernel(%arg0: i32, %arg1: memref<16x32xf32, #tpu.memory_space<vmem>>, %arg2: memref<16x2xf32, #tpu.memory_space<vmem>>, %arg3: memref<16x2xf32, #tpu.memory_space<vmem>>, %arg4: memref<16x8x32xf32, #tpu.memory_space<vmem>>, %arg5: memref<2x16x32xf32, #tpu.memory_space<vmem>>, %arg6: memref<16x32xf32, #tpu.memory_space<vmem>>, %arg7: memref<1x32xf32, #tpu.memory_space<vmem>>, %arg8: memref<64x96xbf16, #tpu.memory_space<vmem>>, %arg9: memref<32x96xbf16, #tpu.memory_space<vmem>>, %arg10: memref<1x96xf32, #tpu.memory_space<vmem>>, %arg11: memref<1x32xf32, #tpu.memory_space<vmem>>, %arg12: memref<64x96xbf16, #tpu.memory_space<vmem>>, %arg13: memref<32x96xbf16, #tpu.memory_space<vmem>>, %arg14: memref<1x96xf32, #tpu.memory_space<vmem>>, %arg15: memref<1x32xf32, #tpu.memory_space<vmem>>, %arg16: memref<32x96xbf16, #tpu.memory_space<vmem>>, %arg17: memref<32x96xbf16, #tpu.memory_space<vmem>>, %arg18: memref<1x96xf32, #tpu.memory_space<vmem>>, %arg19: memref<1x32xf32, #tpu.memory_space<vmem>>, %arg20: memref<16x32xf32, #tpu.memory_space<vmem>>, %arg21: memref<2x16x32xf32, #tpu.memory_space<vmem>>, %arg22: memref<16x32xf32, #tpu.memory_space<vmem>>, %arg23: memref<16x8xf32, #tpu.memory_space<vmem>>) attributes {dimension_semantics = [#tpu.dimension_semantics<arbitrary>], iteration_bounds = array<i64: 1>, scalar_prefetch = 0 : i64, scratch_operands = 0 : i64, tpu.core_type = #tpu.core_type<tc>, window_params = [{transform_indices = @transform_0, window_bounds = array<i64: 16, 32>}, {transform_indices = @transform_1, window_bounds = array<i64: 16, 2>}, {transform_indices = @transform_2, window_bounds = array<i64: 16, 2>}, {transform_indices = @transform_3, window_bounds = array<i64: 16, 8, 32>}, {transform_indices = @transform_4, window_bounds = array<i64: 2, 16, 32>}, {transform_indices = @transform_5, window_bounds = array<i64: 16, 32>}, {pipeline_mode = #tpu.pipeline_mode<synchronous>, transform_indices = @transform_6, window_bounds = array<i64: 1, 32>}, {pipeline_mode = #tpu.pipeline_mode<synchronous>, transform_indices = @transform_7, window_bounds = array<i64: 64, 96>}, {pipeline_mode = #tpu.pipeline_mode<synchronous>, transform_indices = @transform_8, window_bounds = array<i64: 32, 96>}, {pipeline_mode = #tpu.pipeline_mode<synchronous>, transform_indices = @transform_9, window_bounds = array<i64: 1, 96>}, {pipeline_mode = #tpu.pipeline_mode<synchronous>, transform_indices = @transform_10, window_bounds = array<i64: 1, 32>}, {pipeline_mode = #tpu.pipeline_mode<synchronous>, transform_indices = @transform_11, window_bounds = array<i64: 64, 96>}, {pipeline_mode = #tpu.pipeline_mode<synchronous>, transform_indices = @transform_12, window_bounds = array<i64: 32, 96>}, {pipeline_mode = #tpu.pipeline_mode<synchronous>, transform_indices = @transform_13, window_bounds = array<i64: 1, 96>}, {pipeline_mode = #tpu.pipeline_mode<synchronous>, transform_indices = @transform_14, window_bounds = array<i64: 1, 32>}, {pipeline_mode = #tpu.pipeline_mode<synchronous>, transform_indices = @transform_15, window_bounds = array<i64: 32, 96>}, {pipeline_mode = #tpu.pipeline_mode<synchronous>, transform_indices = @transform_16, window_bounds = array<i64: 32, 96>}, {pipeline_mode = #tpu.pipeline_mode<synchronous>, transform_indices = @transform_17, window_bounds = array<i64: 1, 96>}, {pipeline_mode = #tpu.pipeline_mode<synchronous>, transform_indices = @transform_18, window_bounds = array<i64: 1, 32>}, {transform_indices = @transform_19, window_bounds = array<i64: 16, 32>}, {transform_indices = @transform_20, window_bounds = array<i64: 2, 16, 32>}, {transform_indices = @transform_21, window_bounds = array<i64: 16, 32>}, {transform_indices = @transform_22, window_bounds = array<i64: 16, 8>}]} {
    %c0 = arith.constant 0 : index
    %c0_0 = arith.constant 0 : index
    %0 = vector.load %arg1[%c0, %c0_0] : memref<16x32xf32, #tpu.memory_space<vmem>>, vector<16x32xf32>
    %c0_1 = arith.constant 0 : index
    %c0_2 = arith.constant 0 : index
    %1 = vector.load %arg2[%c0_1, %c0_2] : memref<16x2xf32, #tpu.memory_space<vmem>>, vector<16x2xf32>
    %c0_3 = arith.constant 0 : index
    %c0_4 = arith.constant 0 : index
    %2 = vector.load %arg3[%c0_3, %c0_4] : memref<16x2xf32, #tpu.memory_space<vmem>>, vector<16x2xf32>
    %c0_5 = arith.constant 0 : index
    %c0_6 = arith.constant 0 : index
    %c0_7 = arith.constant 0 : index
    %3 = vector.load %arg4[%c0_5, %c0_6, %c0_7] : memref<16x8x32xf32, #tpu.memory_space<vmem>>, vector<16x8x32xf32>
    %c0_8 = arith.constant 0 : index
    %c0_9 = arith.constant 0 : index
    %4 = vector.load %arg6[%c0_8, %c0_9] : memref<16x32xf32, #tpu.memory_space<vmem>>, vector<16x32xf32>
    %c0_10 = arith.constant 0 : index
    %c0_11 = arith.constant 0 : index
    %c0_12 = arith.constant 0 : index
    %5 = vector.load %arg5[%c0_10, %c0_11, %c0_12] : memref<2x16x32xf32, #tpu.memory_space<vmem>>, vector<1x16x32xf32>
    %6 = vector.shape_cast %5 : vector<1x16x32xf32> to vector<16x32xf32>
    %c1 = arith.constant 1 : index
    %c0_13 = arith.constant 0 : index
    %c0_14 = arith.constant 0 : index
    %7 = vector.load %arg5[%c1, %c0_13, %c0_14] : memref<2x16x32xf32, #tpu.memory_space<vmem>>, vector<1x16x32xf32>
    %8 = vector.shape_cast %7 : vector<1x16x32xf32> to vector<16x32xf32>
    %9 = tpu.concatenate %6, %8 in 0 : vector<16x32xf32>, vector<16x32xf32> -> vector<32x32xf32>
    %10 = vector.extract_strided_slice %2 {offsets = [0, 0], sizes = [16, 1], strides = [1, 1]} : vector<16x2xf32> to vector<16x1xf32>
    %11 = vector.broadcast %10 : vector<16x1xf32> to vector<16x32xf32>
    %12 = arith.mulf %6, %11 : vector<16x32xf32>
    %13 = vector.extract_strided_slice %2 {offsets = [0, 1], sizes = [16, 1], strides = [1, 1]} : vector<16x2xf32> to vector<16x1xf32>
    %14 = vector.broadcast %13 : vector<16x1xf32> to vector<16x32xf32>
    %15 = arith.mulf %8, %14 : vector<16x32xf32>
    %16 = arith.addf %12, %15 : vector<16x32xf32>
    %17 = vector.extract_strided_slice %3 {offsets = [0, 7, 0], sizes = [16, 1, 32], strides = [1, 1, 1]} : vector<16x8x32xf32> to vector<16x1x32xf32>
    %18 = vector.shape_cast %17 : vector<16x1x32xf32> to vector<16x32xf32>
    %19 = tpu.concatenate %0, %16 in 1 : vector<16x32xf32>, vector<16x32xf32> -> vector<16x64xf32>
    %c0_15 = arith.constant 0 : index
    %c0_16 = arith.constant 0 : index
    %20 = vector.load %arg8[%c0_15, %c0_16] : memref<64x96xbf16, #tpu.memory_space<vmem>>, vector<64x96xbf16>
    %21 = arith.truncf %19 : vector<16x64xf32> to vector<16x64xbf16>
    %cst = arith.constant dense<0.000000e+00> : vector<16x96xf32>
    %22 = tpu.matmul %21, %20, %cst {dimension_numbers = #tpu.dot_dimension_numbers<[1], [0], [0], [1], [0, 0, 1, 1], [], []>} : vector<16x64xbf16>, vector<64x96xbf16>, vector<16x96xf32> -> vector<16x96xf32>
    %c0_17 = arith.constant 0 : index
    %c0_18 = arith.constant 0 : index
    %23 = vector.load %arg10[%c0_17, %c0_18] : memref<1x96xf32, #tpu.memory_space<vmem>>, vector<1x96xf32>
    %24 = vector.broadcast %23 : vector<1x96xf32> to vector<16x96xf32>
    %25 = arith.addf %22, %24 : vector<16x96xf32>
    %c0_19 = arith.constant 0 : index
    %c0_20 = arith.constant 0 : index
    %26 = vector.load %arg9[%c0_19, %c0_20] : memref<32x96xbf16, #tpu.memory_space<vmem>>, vector<32x96xbf16>
    %27 = arith.truncf %18 : vector<16x32xf32> to vector<16x32xbf16>
    %cst_21 = arith.constant dense<0.000000e+00> : vector<16x96xf32>
    %28 = tpu.matmul %27, %26, %cst_21 {dimension_numbers = #tpu.dot_dimension_numbers<[1], [0], [0], [1], [0, 0, 1, 1], [], []>} : vector<16x32xbf16>, vector<32x96xbf16>, vector<16x96xf32> -> vector<16x96xf32>
    %c0_22 = arith.constant 0 : index
    %c0_23 = arith.constant 0 : index
    %29 = vector.load %arg11[%c0_22, %c0_23] : memref<1x32xf32, #tpu.memory_space<vmem>>, vector<1x32xf32>
    %30 = vector.extract_strided_slice %25 {offsets = [0, 0], sizes = [16, 32], strides = [1, 1]} : vector<16x96xf32> to vector<16x32xf32>
    %31 = vector.extract_strided_slice %28 {offsets = [0, 0], sizes = [16, 32], strides = [1, 1]} : vector<16x96xf32> to vector<16x32xf32>
    %32 = arith.addf %30, %31 : vector<16x32xf32>
    %33 = arith.negf %32 : vector<16x32xf32>
    %34 = math.exp %33 : vector<16x32xf32>
    %cst_24 = arith.constant 1.000000e+00 : f32
    %35 = vector.broadcast %cst_24 : f32 to vector<16x32xf32>
    %36 = arith.addf %35, %34 : vector<16x32xf32>
    %37 = arith.divf %35, %36 : vector<16x32xf32>
    %38 = vector.extract_strided_slice %25 {offsets = [0, 32], sizes = [16, 32], strides = [1, 1]} : vector<16x96xf32> to vector<16x32xf32>
    %39 = vector.extract_strided_slice %28 {offsets = [0, 32], sizes = [16, 32], strides = [1, 1]} : vector<16x96xf32> to vector<16x32xf32>
    %40 = arith.addf %38, %39 : vector<16x32xf32>
    %41 = arith.negf %40 : vector<16x32xf32>
    %42 = math.exp %41 : vector<16x32xf32>
    %cst_25 = arith.constant 1.000000e+00 : f32
    %43 = vector.broadcast %cst_25 : f32 to vector<16x32xf32>
    %44 = arith.addf %43, %42 : vector<16x32xf32>
    %45 = arith.divf %43, %44 : vector<16x32xf32>
    %46 = vector.extract_strided_slice %25 {offsets = [0, 64], sizes = [16, 32], strides = [1, 1]} : vector<16x96xf32> to vector<16x32xf32>
    %47 = vector.extract_strided_slice %28 {offsets = [0, 64], sizes = [16, 32], strides = [1, 1]} : vector<16x96xf32> to vector<16x32xf32>
    %48 = vector.broadcast %29 : vector<1x32xf32> to vector<16x32xf32>
    %49 = arith.addf %47, %48 : vector<16x32xf32>
    %50 = arith.mulf %37, %49 : vector<16x32xf32>
    %51 = arith.addf %46, %50 : vector<16x32xf32>
    %52 = math.tanh %51 : vector<16x32xf32>
    %cst_26 = arith.constant 1.000000e+00 : f32
    %53 = vector.broadcast %cst_26 : f32 to vector<16x32xf32>
    %54 = arith.subf %53, %45 : vector<16x32xf32>
    %55 = arith.mulf %54, %52 : vector<16x32xf32>
    %56 = arith.mulf %45, %18 : vector<16x32xf32>
    %57 = arith.addf %55, %56 : vector<16x32xf32>
    %c0_27 = arith.constant 0 : index
    %c0_28 = arith.constant 0 : index
    %58 = vector.load %arg20[%c0_27, %c0_28] : memref<16x32xf32, #tpu.memory_space<vmem>>, vector<16x32xf32>
    tpu.vector_store %arg20[%c0_27, %c0_28], %57 {strides = array<i32>} : memref<16x32xf32, #tpu.memory_space<vmem>>, vector<16x32xf32>,
    %c0_29 = arith.constant 0 : index
    %c0_30 = arith.constant 0 : index
    %59 = vector.load %arg7[%c0_29, %c0_30] : memref<1x32xf32, #tpu.memory_space<vmem>>, vector<1x32xf32>
    %60 = vector.shape_cast %59 : vector<1x32xf32> to vector<1x1x32xf32>
    %61 = vector.broadcast %60 : vector<1x1x32xf32> to vector<16x8x32xf32>
    %62 = arith.mulf %3, %61 : vector<16x8x32xf32>
    %cst_31 = arith.constant dense<0.000000e+00> : vector<16x8xf32>
    %63 = vector.multi_reduction <add>, %62, %cst_31 [2] : vector<16x8x32xf32> to vector<16x8xf32>
    %cst_32 = arith.constant dense<0xFF800000> : vector<16xf32>
    %64 = vector.multi_reduction <maximumf>, %63, %cst_32 [1] : vector<16x8xf32> to vector<16xf32>
    %65 = vector.shape_cast %64 : vector<16xf32> to vector<16x1xf32>
    %66 = vector.broadcast %65 : vector<16x1xf32> to vector<16x8xf32>
    %67 = arith.subf %63, %66 : vector<16x8xf32>
    %68 = math.exp %67 : vector<16x8xf32>
    %cst_33 = arith.constant dense<0.000000e+00> : vector<16xf32>
    %69 = vector.multi_reduction <add>, %68, %cst_33 [1] : vector<16x8xf32> to vector<16xf32>
    %70 = vector.shape_cast %69 : vector<16xf32> to vector<16x1xf32>
    %71 = tpu.reciprocal %70 {approx = true} : vector<16x1xf32> -> vector<16x1xf32>
    %72 = vector.broadcast %71 : vector<16x1xf32> to vector<16x8xf32>
    %73 = arith.mulf %68, %72 : vector<16x8xf32>
    %c0_34 = arith.constant 0 : index
    %c0_35 = arith.constant 0 : index
    %74 = vector.load %arg23[%c0_34, %c0_35] : memref<16x8xf32, #tpu.memory_space<vmem>>, vector<16x8xf32>
    tpu.vector_store %arg23[%c0_34, %c0_35], %73 {strides = array<i32>} : memref<16x8xf32, #tpu.memory_space<vmem>>, vector<16x8xf32>,
    %75 = vector.shape_cast %73 : vector<16x8xf32> to vector<16x8x1xf32>
    %76 = vector.broadcast %75 : vector<16x8x1xf32> to vector<16x8x32xf32>
    %77 = arith.mulf %76, %3 : vector<16x8x32xf32>
    %cst_36 = arith.constant dense<0.000000e+00> : vector<16x32xf32>
    %78 = vector.multi_reduction <add>, %77, %cst_36 [1] : vector<16x8x32xf32> to vector<16x32xf32>
    %79 = tpu.concatenate %0, %78 in 1 : vector<16x32xf32>, vector<16x32xf32> -> vector<16x64xf32>
    %c0_37 = arith.constant 0 : index
    %c0_38 = arith.constant 0 : index
    %80 = vector.load %arg12[%c0_37, %c0_38] : memref<64x96xbf16, #tpu.memory_space<vmem>>, vector<64x96xbf16>
    %81 = arith.truncf %79 : vector<16x64xf32> to vector<16x64xbf16>
    %cst_39 = arith.constant dense<0.000000e+00> : vector<16x96xf32>
    %82 = tpu.matmul %81, %80, %cst_39 {dimension_numbers = #tpu.dot_dimension_numbers<[1], [0], [0], [1], [0, 0, 1, 1], [], []>} : vector<16x64xbf16>, vector<64x96xbf16>, vector<16x96xf32> -> vector<16x96xf32>
    %c0_40 = arith.constant 0 : index
    %c0_41 = arith.constant 0 : index
    %83 = vector.load %arg14[%c0_40, %c0_41] : memref<1x96xf32, #tpu.memory_space<vmem>>, vector<1x96xf32>
    %84 = vector.broadcast %83 : vector<1x96xf32> to vector<16x96xf32>
    %85 = arith.addf %82, %84 : vector<16x96xf32>
    %86 = tpu.concatenate %85, %85 in 0 : vector<16x96xf32>, vector<16x96xf32> -> vector<32x96xf32>
    %c0_42 = arith.constant 0 : index
    %c0_43 = arith.constant 0 : index
    %87 = vector.load %arg13[%c0_42, %c0_43] : memref<32x96xbf16, #tpu.memory_space<vmem>>, vector<32x96xbf16>
    %88 = arith.truncf %9 : vector<32x32xf32> to vector<32x32xbf16>
    %cst_44 = arith.constant dense<0.000000e+00> : vector<32x96xf32>
    %89 = tpu.matmul %88, %87, %cst_44 {dimension_numbers = #tpu.dot_dimension_numbers<[1], [0], [0], [1], [0, 0, 1, 1], [], []>} : vector<32x32xbf16>, vector<32x96xbf16>, vector<32x96xf32> -> vector<32x96xf32>
    %c0_45 = arith.constant 0 : index
    %c0_46 = arith.constant 0 : index
    %90 = vector.load %arg15[%c0_45, %c0_46] : memref<1x32xf32, #tpu.memory_space<vmem>>, vector<1x32xf32>
    %91 = vector.extract_strided_slice %86 {offsets = [0, 0], sizes = [32, 32], strides = [1, 1]} : vector<32x96xf32> to vector<32x32xf32>
    %92 = vector.extract_strided_slice %89 {offsets = [0, 0], sizes = [32, 32], strides = [1, 1]} : vector<32x96xf32> to vector<32x32xf32>
    %93 = arith.addf %91, %92 : vector<32x32xf32>
    %94 = arith.negf %93 : vector<32x32xf32>
    %95 = math.exp %94 : vector<32x32xf32>
    %cst_47 = arith.constant 1.000000e+00 : f32
    %96 = vector.broadcast %cst_47 : f32 to vector<32x32xf32>
    %97 = arith.addf %96, %95 : vector<32x32xf32>
    %98 = arith.divf %96, %97 : vector<32x32xf32>
    %99 = vector.extract_strided_slice %86 {offsets = [0, 32], sizes = [32, 32], strides = [1, 1]} : vector<32x96xf32> to vector<32x32xf32>
    %100 = vector.extract_strided_slice %89 {offsets = [0, 32], sizes = [32, 32], strides = [1, 1]} : vector<32x96xf32> to vector<32x32xf32>
    %101 = arith.addf %99, %100 : vector<32x32xf32>
    %102 = arith.negf %101 : vector<32x32xf32>
    %103 = math.exp %102 : vector<32x32xf32>
    %cst_48 = arith.constant 1.000000e+00 : f32
    %104 = vector.broadcast %cst_48 : f32 to vector<32x32xf32>
    %105 = arith.addf %104, %103 : vector<32x32xf32>
    %106 = arith.divf %104, %105 : vector<32x32xf32>
    %107 = vector.extract_strided_slice %86 {offsets = [0, 64], sizes = [32, 32], strides = [1, 1]} : vector<32x96xf32> to vector<32x32xf32>
    %108 = vector.extract_strided_slice %89 {offsets = [0, 64], sizes = [32, 32], strides = [1, 1]} : vector<32x96xf32> to vector<32x32xf32>
    %109 = vector.broadcast %90 : vector<1x32xf32> to vector<32x32xf32>
    %110 = arith.addf %108, %109 : vector<32x32xf32>
    %111 = arith.mulf %98, %110 : vector<32x32xf32>
    %112 = arith.addf %107, %111 : vector<32x32xf32>
    %113 = math.tanh %112 : vector<32x32xf32>
    %cst_49 = arith.constant 1.000000e+00 : f32
    %114 = vector.broadcast %cst_49 : f32 to vector<32x32xf32>
    %115 = arith.subf %114, %106 : vector<32x32xf32>
    %116 = arith.mulf %115, %113 : vector<32x32xf32>
    %117 = arith.mulf %106, %9 : vector<32x32xf32>
    %118 = arith.addf %116, %117 : vector<32x32xf32>
    %119 = vector.extract_strided_slice %1 {offsets = [0, 0], sizes = [16, 1], strides = [1, 1]} : vector<16x2xf32> to vector<16x1xf32>
    %120 = vector.extract_strided_slice %1 {offsets = [0, 1], sizes = [16, 1], strides = [1, 1]} : vector<16x2xf32> to vector<16x1xf32>
    %121 = tpu.concatenate %119, %120 in 0 : vector<16x1xf32>, vector<16x1xf32> -> vector<32x1xf32>
    %cst_50 = arith.constant 1.000000e+00 : f32
    %122 = vector.broadcast %cst_50 : f32 to vector<32x1xf32>
    %123 = arith.subf %122, %121 : vector<32x1xf32>
    %124 = vector.broadcast %123 : vector<32x1xf32> to vector<32x32xf32>
    %125 = arith.mulf %9, %124 : vector<32x32xf32>
    %126 = vector.broadcast %121 : vector<32x1xf32> to vector<32x32xf32>
    %127 = arith.mulf %118, %126 : vector<32x32xf32>
    %128 = arith.addf %125, %127 : vector<32x32xf32>
    %129 = vector.shape_cast %128 : vector<32x32xf32> to vector<2x16x32xf32>
    %c0_51 = arith.constant 0 : index
    %c0_52 = arith.constant 0 : index
    %c0_53 = arith.constant 0 : index
    %130 = vector.load %arg21[%c0_51, %c0_52, %c0_53] : memref<2x16x32xf32, #tpu.memory_space<vmem>>, vector<2x16x32xf32>
    tpu.vector_store %arg21[%c0_51, %c0_52, %c0_53], %129 {strides = array<i32>} : memref<2x16x32xf32, #tpu.memory_space<vmem>>, vector<2x16x32xf32>,
    %131 = vector.extract_strided_slice %128 {offsets = [0, 0], sizes = [16, 32], strides = [1, 1]} : vector<32x32xf32> to vector<16x32xf32>
    %132 = vector.extract_strided_slice %2 {offsets = [0, 0], sizes = [16, 1], strides = [1, 1]} : vector<16x2xf32> to vector<16x1xf32>
    %133 = vector.broadcast %132 : vector<16x1xf32> to vector<16x32xf32>
    %134 = arith.mulf %131, %133 : vector<16x32xf32>
    %135 = vector.extract_strided_slice %128 {offsets = [16, 0], sizes = [16, 32], strides = [1, 1]} : vector<32x32xf32> to vector<16x32xf32>
    %136 = vector.extract_strided_slice %2 {offsets = [0, 1], sizes = [16, 1], strides = [1, 1]} : vector<16x2xf32> to vector<16x1xf32>
    %137 = vector.broadcast %136 : vector<16x1xf32> to vector<16x32xf32>
    %138 = arith.mulf %135, %137 : vector<16x32xf32>
    %139 = arith.addf %134, %138 : vector<16x32xf32>
    %c0_54 = arith.constant 0 : index
    %c0_55 = arith.constant 0 : index
    %140 = vector.load %arg16[%c0_54, %c0_55] : memref<32x96xbf16, #tpu.memory_space<vmem>>, vector<32x96xbf16>
    %141 = arith.truncf %139 : vector<16x32xf32> to vector<16x32xbf16>
    %cst_56 = arith.constant dense<0.000000e+00> : vector<16x96xf32>
    %142 = tpu.matmul %141, %140, %cst_56 {dimension_numbers = #tpu.dot_dimension_numbers<[1], [0], [0], [1], [0, 0, 1, 1], [], []>} : vector<16x32xbf16>, vector<32x96xbf16>, vector<16x96xf32> -> vector<16x96xf32>
    %c0_57 = arith.constant 0 : index
    %c0_58 = arith.constant 0 : index
    %143 = vector.load %arg18[%c0_57, %c0_58] : memref<1x96xf32, #tpu.memory_space<vmem>>, vector<1x96xf32>
    %144 = vector.broadcast %143 : vector<1x96xf32> to vector<16x96xf32>
    %145 = arith.addf %142, %144 : vector<16x96xf32>
    %c0_59 = arith.constant 0 : index
    %c0_60 = arith.constant 0 : index
    %146 = vector.load %arg17[%c0_59, %c0_60] : memref<32x96xbf16, #tpu.memory_space<vmem>>, vector<32x96xbf16>
    %147 = arith.truncf %4 : vector<16x32xf32> to vector<16x32xbf16>
    %cst_61 = arith.constant dense<0.000000e+00> : vector<16x96xf32>
    %148 = tpu.matmul %147, %146, %cst_61 {dimension_numbers = #tpu.dot_dimension_numbers<[1], [0], [0], [1], [0, 0, 1, 1], [], []>} : vector<16x32xbf16>, vector<32x96xbf16>, vector<16x96xf32> -> vector<16x96xf32>
    %c0_62 = arith.constant 0 : index
    %c0_63 = arith.constant 0 : index
    %149 = vector.load %arg19[%c0_62, %c0_63] : memref<1x32xf32, #tpu.memory_space<vmem>>, vector<1x32xf32>
    %150 = vector.extract_strided_slice %145 {offsets = [0, 0], sizes = [16, 32], strides = [1, 1]} : vector<16x96xf32> to vector<16x32xf32>
    %151 = vector.extract_strided_slice %148 {offsets = [0, 0], sizes = [16, 32], strides = [1, 1]} : vector<16x96xf32> to vector<16x32xf32>
    %152 = arith.addf %150, %151 : vector<16x32xf32>
    %153 = arith.negf %152 : vector<16x32xf32>
    %154 = math.exp %153 : vector<16x32xf32>
    %cst_64 = arith.constant 1.000000e+00 : f32
    %155 = vector.broadcast %cst_64 : f32 to vector<16x32xf32>
    %156 = arith.addf %155, %154 : vector<16x32xf32>
    %157 = arith.divf %155, %156 : vector<16x32xf32>
    %158 = vector.extract_strided_slice %145 {offsets = [0, 32], sizes = [16, 32], strides = [1, 1]} : vector<16x96xf32> to vector<16x32xf32>
    %159 = vector.extract_strided_slice %148 {offsets = [0, 32], sizes = [16, 32], strides = [1, 1]} : vector<16x96xf32> to vector<16x32xf32>
    %160 = arith.addf %158, %159 : vector<16x32xf32>
    %161 = arith.negf %160 : vector<16x32xf32>
    %162 = math.exp %161 : vector<16x32xf32>
    %cst_65 = arith.constant 1.000000e+00 : f32
    %163 = vector.broadcast %cst_65 : f32 to vector<16x32xf32>
    %164 = arith.addf %163, %162 : vector<16x32xf32>
    %165 = arith.divf %163, %164 : vector<16x32xf32>
    %166 = vector.extract_strided_slice %145 {offsets = [0, 64], sizes = [16, 32], strides = [1, 1]} : vector<16x96xf32> to vector<16x32xf32>
    %167 = vector.extract_strided_slice %148 {offsets = [0, 64], sizes = [16, 32], strides = [1, 1]} : vector<16x96xf32> to vector<16x32xf32>
    %168 = vector.broadcast %149 : vector<1x32xf32> to vector<16x32xf32>
    %169 = arith.addf %167, %168 : vector<16x32xf32>
    %170 = arith.mulf %157, %169 : vector<16x32xf32>
    %171 = arith.addf %166, %170 : vector<16x32xf32>
    %172 = math.tanh %171 : vector<16x32xf32>
    %cst_66 = arith.constant 1.000000e+00 : f32
    %173 = vector.broadcast %cst_66 : f32 to vector<16x32xf32>
    %174 = arith.subf %173, %165 : vector<16x32xf32>
    %175 = arith.mulf %174, %172 : vector<16x32xf32>
    %176 = arith.mulf %165, %4 : vector<16x32xf32>
    %177 = arith.addf %175, %176 : vector<16x32xf32>
    %c0_67 = arith.constant 0 : index
    %c0_68 = arith.constant 0 : index
    %178 = vector.load %arg22[%c0_67, %c0_68] : memref<16x32xf32, #tpu.memory_space<vmem>>, vector<16x32xf32>
    tpu.vector_store %arg22[%c0_67, %c0_68], %177 {strides = array<i32>} : memref<16x32xf32, #tpu.memory_space<vmem>>, vector<16x32xf32>,
    return
  }
  func.func @transform_0(%arg0: i32) -> (i32, i32) {
    %c0_i32 = arith.constant 0 : i32
    %c0_i32_0 = arith.constant 0 : i32
    return %arg0, %c0_i32 : i32, i32
  }
  func.func @transform_1(%arg0: i32) -> (i32, i32) {
    %c0_i32 = arith.constant 0 : i32
    %c0_i32_0 = arith.constant 0 : i32
    return %arg0, %c0_i32 : i32, i32
  }
  func.func @transform_2(%arg0: i32) -> (i32, i32) {
    %c0_i32 = arith.constant 0 : i32
    %c0_i32_0 = arith.constant 0 : i32
    return %arg0, %c0_i32 : i32, i32
  }
  func.func @transform_3(%arg0: i32) -> (i32, i32, i32) {
    %c0_i32 = arith.constant 0 : i32
    %c0_i32_0 = arith.constant 0 : i32
    %c0_i32_1 = arith.constant 0 : i32
    return %arg0, %c0_i32, %c0_i32_0 : i32, i32, i32
  }
  func.func @transform_4(%arg0: i32) -> (i32, i32, i32) {
    %c0_i32 = arith.constant 0 : i32
    %c0_i32_0 = arith.constant 0 : i32
    %c0_i32_1 = arith.constant 0 : i32
    return %c0_i32, %arg0, %c0_i32_0 : i32, i32, i32
  }
  func.func @transform_5(%arg0: i32) -> (i32, i32) {
    %c0_i32 = arith.constant 0 : i32
    %c0_i32_0 = arith.constant 0 : i32
    return %arg0, %c0_i32 : i32, i32
  }
  func.func @transform_6(%arg0: i32) -> (i32, i32) {
    %c0_i32 = arith.constant 0 : i32
    %c0_i32_0 = arith.constant 0 : i32
    %c0_i32_1 = arith.constant 0 : i32
    return %c0_i32, %c0_i32_0 : i32, i32
  }
  func.func @transform_7(%arg0: i32) -> (i32, i32) {
    %c0_i32 = arith.constant 0 : i32
    %c0_i32_0 = arith.constant 0 : i32
    %c0_i32_1 = arith.constant 0 : i32
    return %c0_i32, %c0_i32_0 : i32, i32
  }
  func.func @transform_8(%arg0: i32) -> (i32, i32) {
    %c0_i32 = arith.constant 0 : i32
    %c0_i32_0 = arith.constant 0 : i32
    %c0_i32_1 = arith.constant 0 : i32
    return %c0_i32, %c0_i32_0 : i32, i32
  }
  func.func @transform_9(%arg0: i32) -> (i32, i32) {
    %c0_i32 = arith.constant 0 : i32
    %c0_i32_0 = arith.constant 0 : i32
    %c0_i32_1 = arith.constant 0 : i32
    return %c0_i32, %c0_i32_0 : i32, i32
  }
  func.func @transform_10(%arg0: i32) -> (i32, i32) {
    %c0_i32 = arith.constant 0 : i32
    %c0_i32_0 = arith.constant 0 : i32
    %c0_i32_1 = arith.constant 0 : i32
    return %c0_i32, %c0_i32_0 : i32, i32
  }
  func.func @transform_11(%arg0: i32) -> (i32, i32) {
    %c0_i32 = arith.constant 0 : i32
    %c0_i32_0 = arith.constant 0 : i32
    %c0_i32_1 = arith.constant 0 : i32
    return %c0_i32, %c0_i32_0 : i32, i32
  }
  func.func @transform_12(%arg0: i32) -> (i32, i32) {
    %c0_i32 = arith.constant 0 : i32
    %c0_i32_0 = arith.constant 0 : i32
    %c0_i32_1 = arith.constant 0 : i32
    return %c0_i32, %c0_i32_0 : i32, i32
  }
  func.func @transform_13(%arg0: i32) -> (i32, i32) {
    %c0_i32 = arith.constant 0 : i32
    %c0_i32_0 = arith.constant 0 : i32
    %c0_i32_1 = arith.constant 0 : i32
    return %c0_i32, %c0_i32_0 : i32, i32
  }
  func.func @transform_14(%arg0: i32) -> (i32, i32) {
    %c0_i32 = arith.constant 0 : i32
    %c0_i32_0 = arith.constant 0 : i32
    %c0_i32_1 = arith.constant 0 : i32
    return %c0_i32, %c0_i32_0 : i32, i32
  }
  func.func @transform_15(%arg0: i32) -> (i32, i32) {
    %c0_i32 = arith.constant 0 : i32
    %c0_i32_0 = arith.constant 0 : i32
    %c0_i32_1 = arith.constant 0 : i32
    return %c0_i32, %c0_i32_0 : i32, i32
  }
  func.func @transform_16(%arg0: i32) -> (i32, i32) {
    %c0_i32 = arith.constant 0 : i32
    %c0_i32_0 = arith.constant 0 : i32
    %c0_i32_1 = arith.constant 0 : i32
    return %c0_i32, %c0_i32_0 : i32, i32
  }
  func.func @transform_17(%arg0: i32) -> (i32, i32) {
    %c0_i32 = arith.constant 0 : i32
    %c0_i32_0 = arith.constant 0 : i32
    %c0_i32_1 = arith.constant 0 : i32
    return %c0_i32, %c0_i32_0 : i32, i32
  }
  func.func @transform_18(%arg0: i32) -> (i32, i32) {
    %c0_i32 = arith.constant 0 : i32
    %c0_i32_0 = arith.constant 0 : i32
    %c0_i32_1 = arith.constant 0 : i32
    return %c0_i32, %c0_i32_0 : i32, i32
  }
  func.func @transform_19(%arg0: i32) -> (i32, i32) {
    %c0_i32 = arith.constant 0 : i32
    %c0_i32_0 = arith.constant 0 : i32
    return %arg0, %c0_i32 : i32, i32
  }
  func.func @transform_20(%arg0: i32) -> (i32, i32, i32) {
    %c0_i32 = arith.constant 0 : i32
    %c0_i32_0 = arith.constant 0 : i32
    %c0_i32_1 = arith.constant 0 : i32
    return %c0_i32, %arg0, %c0_i32_0 : i32, i32, i32
  }
  func.func @transform_21(%arg0: i32) -> (i32, i32) {
    %c0_i32 = arith.constant 0 : i32
    %c0_i32_0 = arith.constant 0 : i32
    return %arg0, %c0_i32 : i32, i32
  }
  func.func @transform_22(%arg0: i32) -> (i32, i32) {
    %c0_i32 = arith.constant 0 : i32
    %c0_i32_0 = arith.constant 0 : i32
    return %arg0, %c0_i32 : i32, i32
  }
}

</mosaic_0001>

<llo_original>
// kernel: tpu_custom_call.1
$region0: #{tpu_custom_call.1}
  #allocation0 [shape = 'u32[]', space=smem, size = 0x4, offset = 0x4, fixed_abs, tag = 'smem constant byte address 0x4 - core index']
  #allocation1 [shape = 'u32[144,128]{1,0:T(1,128)}', space=vmem, size = 0x12000, scoped, tag = 'internal scratch']
  %s0 = inlined_call_operand.hbm [shape: f32[16,32], index: 0, kind: input, shape index: {}]
  %s1 = inlined_call_operand.vmem [shape: f32[16,2], index: 1, kind: input, shape index: {}]
  %s2 = inlined_call_operand.vmem [shape: f32[16,2], index: 2, kind: input, shape index: {}]
  %s3 = inlined_call_operand.hbm [shape: f32[16,8,32], index: 3, kind: input, shape index: {}]
  %s4 = inlined_call_operand.vmem [shape: f32[2,16,32], index: 4, kind: input, shape index: {}]
  %s5 = inlined_call_operand.hbm [shape: f32[16,32], index: 5, kind: input, shape index: {}]
  %s6 = inlined_call_operand.hbm [shape: f32[1,32], index: 6, kind: input, shape index: {}]
  %s7 = inlined_call_operand.hbm [shape: bf16[64,96], index: 7, kind: input, shape index: {}]
  %s8 = inlined_call_operand.hbm [shape: bf16[32,96], index: 8, kind: input, shape index: {}]
  %s9 = inlined_call_operand.hbm [shape: f32[1,96], index: 9, kind: input, shape index: {}]
  %s10 = inlined_call_operand.hbm [shape: f32[1,32], index: 10, kind: input, shape index: {}]
  %s11 = inlined_call_operand.vmem [shape: bf16[64,96], index: 11, kind: input, shape index: {}]
  %s12 = inlined_call_operand.vmem [shape: bf16[32,96], index: 12, kind: input, shape index: {}]
  %s13 = inlined_call_operand.hbm [shape: f32[1,96], index: 13, kind: input, shape index: {}]
  %s14 = inlined_call_operand.hbm [shape: f32[1,32], index: 14, kind: input, shape index: {}]
  %s15 = inlined_call_operand.hbm [shape: bf16[32,96], index: 15, kind: input, shape index: {}]
  %s16 = inlined_call_operand.vmem [shape: bf16[32,96], index: 16, kind: input, shape index: {}]
  %s17 = inlined_call_operand.vmem [shape: f32[1,96], index: 17, kind: input, shape index: {}]
  %s18 = inlined_call_operand.vmem [shape: f32[1,32], index: 18, kind: input, shape index: {}]
  %s19 = inlined_call_operand.hbm [shape: f32[16,32], index: 19, kind: output, shape index: {0}]
  %s20 = inlined_call_operand.hbm [shape: f32[2,16,32], index: 20, kind: output, shape index: {1}]
  %s21 = inlined_call_operand.hbm [shape: f32[16,32], index: 21, kind: output, shape index: {2}]
  %s22 = inlined_call_operand.vmem [shape: f32[16,8], index: 22, kind: output, shape index: {3}]
  %23 = xla_tuple %s19, %s20, %s21, %s22
  %s24 = sld [smem:[#allocation0]]
  $region154: #{tpu_custom_call.1} parent=0
    _
  %s26 = ssub.s32 1, %s24
  %s27 = scalar_select 0, %s26, %s24
  $region1: #{tpu_custom_call.1} parent=0
    #allocation2 [shape = 'u8[8192]{0}', space=vmem, size = 0x2000, scoped, tag = 'input window, operand 0, single buffered']
    #allocation3 [shape = 's32[1]{0}', space=sflag, size = 0x4, scoped, tag = 'scoped memory for tpu_custom_call.1']
    #allocation4 [shape = 's32[1]{0}', space=sflag, size = 0x4, scoped, tag = 'scoped memory for tpu_custom_call.1']
    #allocation5 [shape = 'u8[65536]{0}', space=vmem, size = 0x10000, scoped, tag = 'input window, operand 3, single buffered']
    #allocation6 [shape = 's32[1]{0}', space=sflag, size = 0x4, scoped, tag = 'scoped memory for tpu_custom_call.1']
    #allocation7 [shape = 'u8[8192]{0}', space=vmem, size = 0x2000, scoped, tag = 'input window, operand 5, single buffered']
    #allocation8 [shape = 'u8[512]{0}', space=vmem, size = 0x400, scoped, tag = 'input window, operand 6, single buffered']
    #allocation9 [shape = 's32[1]{0}', space=sflag, size = 0x4, scoped, tag = 'scoped memory for tpu_custom_call.1']
    #allocation10 [shape = 'u8[16384]{0}', space=vmem, size = 0x4000, scoped, tag = 'input window, operand 7, single buffered']
    #allocation11 [shape = 'u8[8192]{0}', space=vmem, size = 0x2000, scoped, tag = 'input window, operand 8, single buffered']
    #allocation12 [shape = 's32[1]{0}', space=sflag, size = 0x4, scoped, tag = 'scoped memory for tpu_custom_call.1']
    #allocation13 [shape = 'u8[512]{0}', space=vmem, size = 0x400, scoped, tag = 'input window, operand 9, single buffered']
    #allocation14 [shape = 'u8[512]{0}', space=vmem, size = 0x400, scoped, tag = 'input window, operand 10, single buffered']
    #allocation15 [shape = 's32[1]{0}', space=sflag, size = 0x4, scoped, tag = 'scoped memory for tpu_custom_call.1']
    #allocation16 [shape = 'u8[512]{0}', space=vmem, size = 0x400, scoped, tag = 'input window, operand 13, single buffered']
    #allocation17 [shape = 'u8[512]{0}', space=vmem, size = 0x400, scoped, tag = 'input window, operand 14, single buffered']
    #allocation18 [shape = 's32[1]{0}', space=sflag, size = 0x4, scoped, tag = 'scoped memory for tpu_custom_call.1']
    #allocation19 [shape = 'u8[8192]{0}', space=vmem, size = 0x2000, scoped, tag = 'input window, operand 15, single buffered']
    #allocation20 [shape = 'u8[8192]{0}', space=vmem, size = 0x2000, scoped, tag = 'output window, operand 0, single buffered']
    #allocation21 [shape = 'u8[16384]{0}', space=vmem, size = 0x4000, scoped, tag = 'output window, operand 1, single buffered']
    #allocation22 [shape = 's32[1]{0}', space=sflag, size = 0x4, scoped, tag = 'scoped memory for tpu_custom_call.1']
    #allocation23 [shape = 'u8[8192]{0}', space=vmem, size = 0x2000, scoped, tag = 'output window, operand 2, single buffered']
    %28 = vsyncpa [#allocation3], 0
    %29 = vsyncpa [#allocation6], 0
    %30 = vsyncpa [#allocation9], 0
    %31 = vsyncpa [#allocation12], 0
    %32 = vsyncpa [#allocation15], 0
    %33 = vsyncpa [#allocation18], 0
    %34 = vsyncpa [#allocation4], 0
    %35 = vsyncpa [#allocation22], 0
    // Predicated region
    $region2: #{tpu_custom_call.1} parent=1 // pred_check
      _
    $region3: #{tpu_custom_call.1} parent=1 // pred_check_branch
      %37 = sbr.rel (0) target = $region5
    $region4: #{tpu_custom_call.1} parent=1 // pred_region
      %s39 = ssub.s32 256, 256
      %40 = vsyncadd [#allocation3], %s39
      %s41 = sshll.u32 [#allocation2], 4
      %s42 = int_to_ptr.vmem [resolvable:$true] %s41
      %47 = dma.hbm_to_vmem [thread:$0]  %s0, 256, %s42, [#allocation3], 128, 128, 8
    $region5: #{tpu_custom_call.1} parent=1 // pred_fallthru
      _
    // Predicated region
    $region6: #{tpu_custom_call.1} parent=1 // pred_check
      _
    $region7: #{tpu_custom_call.1} parent=1 // pred_check_branch
      %49 = sbr.rel (0) target = $region9
    $region8: #{tpu_custom_call.1} parent=1 // pred_region
      _
    $region9: #{tpu_custom_call.1} parent=1 // pred_fallthru
      _
    // Predicated region
    $region10: #{tpu_custom_call.1} parent=1 // pred_check
      _
    $region11: #{tpu_custom_call.1} parent=1 // pred_check_branch
      %51 = sbr.rel (0) target = $region13
    $region12: #{tpu_custom_call.1} parent=1 // pred_region
      _
    $region13: #{tpu_custom_call.1} parent=1 // pred_fallthru
      _
    // Predicated region
    $region14: #{tpu_custom_call.1} parent=1 // pred_check
      _
    $region15: #{tpu_custom_call.1} parent=1 // pred_check_branch
      %53 = sbr.rel (0) target = $region17
    $region16: #{tpu_custom_call.1} parent=1 // pred_region
      %s55 = ssub.s32 2048, 2048
      %56 = vsyncadd [#allocation6], %s55
      %s57 = sshll.u32 [#allocation5], 4
      %s58 = int_to_ptr.vmem [resolvable:$true] %s57
      %63 = dma.hbm_to_vmem [thread:$0]  %s3, 2048, %s58, [#allocation6], 128, 128, 8
    $region17: #{tpu_custom_call.1} parent=1 // pred_fallthru
      _
    // Predicated region
    $region18: #{tpu_custom_call.1} parent=1 // pred_check
      _
    $region19: #{tpu_custom_call.1} parent=1 // pred_check_branch
      %65 = sbr.rel (0) target = $region21
    $region20: #{tpu_custom_call.1} parent=1 // pred_region
      _
    $region21: #{tpu_custom_call.1} parent=1 // pred_fallthru
      _
    // Predicated region
    $region22: #{tpu_custom_call.1} parent=1 // pred_check
      _
    $region23: #{tpu_custom_call.1} parent=1 // pred_check_branch
      %67 = sbr.rel (0) target = $region25
    $region24: #{tpu_custom_call.1} parent=1 // pred_region
      %s69 = ssub.s32 256, 256
      %70 = vsyncadd [#allocation6], %s69
      %s71 = sshll.u32 [#allocation7], 4
      %s72 = int_to_ptr.vmem [resolvable:$true] %s71
      %77 = dma.hbm_to_vmem [thread:$0]  %s5, 256, %s72, [#allocation6], 128, 128, 8
    $region25: #{tpu_custom_call.1} parent=1 // pred_fallthru
      _
    // Predicated region
    $region26: #{tpu_custom_call.1} parent=1 // pred_check
      _
    $region27: #{tpu_custom_call.1} parent=1 // pred_check_branch
      %79 = sbr.rel (0) target = $region29
    $region28: #{tpu_custom_call.1} parent=1 // pred_region
      %s81 = ssub.s32 16, 16
      %82 = vsyncadd [#allocation9], %s81
      %s84 = sshll.u32 [#allocation8], 4
      %s85 = int_to_ptr.vmem [resolvable:$true] %s84
      %87 = dma.hbm_to_vmem [thread:$0]  %s6, 16, %s85, [#allocation9]
    $region29: #{tpu_custom_call.1} parent=1 // pred_fallthru
      _
    // Predicated region
    $region30: #{tpu_custom_call.1} parent=1 // pred_check
      _
    $region31: #{tpu_custom_call.1} parent=1 // pred_check_branch
      %89 = sbr.rel (0) target = $region33
    $region32: #{tpu_custom_call.1} parent=1 // pred_region
      %s91 = ssub.s32 512, 512
      %92 = vsyncadd [#allocation9], %s91
      %s93 = sshll.u32 [#allocation10], 4
      %s94 = int_to_ptr.vmem [resolvable:$true] %s93
      %99 = dma.hbm_to_vmem [thread:$0]  %s7, 512, %s94, [#allocation9], 64, 64, 4
    $region33: #{tpu_custom_call.1} parent=1 // pred_fallthru
      _
    // Predicated region
    $region34: #{tpu_custom_call.1} parent=1 // pred_check
      _
    $region35: #{tpu_custom_call.1} parent=1 // pred_check_branch
      %101 = sbr.rel (0) target = $region37
    $region36: #{tpu_custom_call.1} parent=1 // pred_region
      %s103 = ssub.s32 256, 256
      %104 = vsyncadd [#allocation12], %s103
      %s105 = sshll.u32 [#allocation11], 4
      %s106 = int_to_ptr.vmem [resolvable:$true] %s105
      %111 = dma.hbm_to_vmem [thread:$0]  %s8, 256, %s106, [#allocation12], 64, 64, 4
    $region37: #{tpu_custom_call.1} parent=1 // pred_fallthru
      _
    // Predicated region
    $region38: #{tpu_custom_call.1} parent=1 // pred_check
      _
    $region39: #{tpu_custom_call.1} parent=1 // pred_check_branch
      %113 = sbr.rel (0) target = $region41
    $region40: #{tpu_custom_call.1} parent=1 // pred_region
      %s115 = ssub.s32 16, 16
      %116 = vsyncadd [#allocation12], %s115
      %s118 = sshll.u32 [#allocation13], 4
      %s119 = int_to_ptr.vmem [resolvable:$true] %s118
      %121 = dma.hbm_to_vmem [thread:$0]  %s9, 16, %s119, [#allocation12]
    $region41: #{tpu_custom_call.1} parent=1 // pred_fallthru
      _
    // Predicated region
    $region42: #{tpu_custom_call.1} parent=1 // pred_check
      _
    $region43: #{tpu_custom_call.1} parent=1 // pred_check_branch
      %123 = sbr.rel (0) target = $region45
    $region44: #{tpu_custom_call.1} parent=1 // pred_region
      %s125 = ssub.s32 16, 16
      %126 = vsyncadd [#allocation15], %s125
      %s128 = sshll.u32 [#allocation14], 4
      %s129 = int_to_ptr.vmem [resolvable:$true] %s128
      %131 = dma.hbm_to_vmem [thread:$0]  %s10, 16, %s129, [#allocation15]
    $region45: #{tpu_custom_call.1} parent=1 // pred_fallthru
      _
    // Predicated region
    $region46: #{tpu_custom_call.1} parent=1 // pred_check
      _
    $region47: #{tpu_custom_call.1} parent=1 // pred_check_branch
      %133 = sbr.rel (0) target = $region49
    $region48: #{tpu_custom_call.1} parent=1 // pred_region
      _
    $region49: #{tpu_custom_call.1} parent=1 // pred_fallthru
      _
    // Predicated region
    $region50: #{tpu_custom_call.1} parent=1 // pred_check
      _
    $region51: #{tpu_custom_call.1} parent=1 // pred_check_branch
      %135 = sbr.rel (0) target = $region53
    $region52: #{tpu_custom_call.1} parent=1 // pred_region
      _
    $region53: #{tpu_custom_call.1} parent=1 // pred_fallthru
      _
    // Predicated region
    $region54: #{tpu_custom_call.1} parent=1 // pred_check
      _
    $region55: #{tpu_custom_call.1} parent=1 // pred_check_branch
      %137 = sbr.rel (0) target = $region57
    $region56: #{tpu_custom_call.1} parent=1 // pred_region
      %s139 = ssub.s32 16, 16
      %140 = vsyncadd [#allocation15], %s139
      %s142 = sshll.u32 [#allocation16], 4
      %s143 = int_to_ptr.vmem [resolvable:$true] %s142
      %145 = dma.hbm_to_vmem [thread:$0]  %s13, 16, %s143, [#allocation15]
    $region57: #{tpu_custom_call.1} parent=1 // pred_fallthru
      _
    // Predicated region
    $region58: #{tpu_custom_call.1} parent=1 // pred_check
      _
    $region59: #{tpu_custom_call.1} parent=1 // pred_check_branch
      %147 = sbr.rel (0) target = $region61
    $region60: #{tpu_custom_call.1} parent=1 // pred_region
      %s149 = ssub.s32 16, 16
      %150 = vsyncadd [#allocation18], %s149
      %s152 = sshll.u32 [#allocation17], 4
      %s153 = int_to_ptr.vmem [resolvable:$true] %s152
      %155 = dma.hbm_to_vmem [thread:$0]  %s14, 16, %s153, [#allocation18]
    $region61: #{tpu_custom_call.1} parent=1 // pred_fallthru
      _
    // Predicated region
    $region62: #{tpu_custom_call.1} parent=1 // pred_check
      _
    $region63: #{tpu_custom_call.1} parent=1 // pred_check_branch
      %157 = sbr.rel (0) target = $region65
    $region64: #{tpu_custom_call.1} parent=1 // pred_region
      %s159 = ssub.s32 256, 256
      %160 = vsyncadd [#allocation18], %s159
      %s161 = sshll.u32 [#allocation19], 4
      %s162 = int_to_ptr.vmem [resolvable:$true] %s161
      %167 = dma.hbm_to_vmem [thread:$0]  %s15, 256, %s162, [#allocation18], 64, 64, 4
    $region65: #{tpu_custom_call.1} parent=1 // pred_fallthru
      _
    // Predicated region
    $region66: #{tpu_custom_call.1} parent=1 // pred_check
      _
    $region67: #{tpu_custom_call.1} parent=1 // pred_check_branch
      %169 = sbr.rel (0) target = $region69
    $region68: #{tpu_custom_call.1} parent=1 // pred_region
      _
    $region69: #{tpu_custom_call.1} parent=1 // pred_fallthru
      _
    // Predicated region
    $region70: #{tpu_custom_call.1} parent=1 // pred_check
      _
    $region71: #{tpu_custom_call.1} parent=1 // pred_check_branch
      %171 = sbr.rel (0) target = $region73
    $region72: #{tpu_custom_call.1} parent=1 // pred_region
      _
    $region73: #{tpu_custom_call.1} parent=1 // pred_fallthru
      _
    // Predicated region
    $region74: #{tpu_custom_call.1} parent=1 // pred_check
      _
    $region75: #{tpu_custom_call.1} parent=1 // pred_check_branch
      %173 = sbr.rel (0) target = $region77
    $region76: #{tpu_custom_call.1} parent=1 // pred_region
      _
    $region77: #{tpu_custom_call.1} parent=1 // pred_fallthru
      _
    // Predicated region
    $region78: #{tpu_custom_call.1} parent=1 // pred_check
      _
    $region79: #{tpu_custom_call.1} parent=1 // pred_check_branch
      %175 = sbr.rel (0) target = $region81
    $region80: #{tpu_custom_call.1} parent=1 // pred_region
      %176 = dma.done [#allocation3], 256
    $region81: #{tpu_custom_call.1} parent=1 // pred_fallthru
      _
    // Predicated region
    $region82: #{tpu_custom_call.1} parent=1 // pred_check
      _
    $region83: #{tpu_custom_call.1} parent=1 // pred_check_branch
      %178 = sbr.rel (0) target = $region85
    $region84: #{tpu_custom_call.1} parent=1 // pred_region
      %179 = dma.done [#allocation6], 2048
    $region85: #{tpu_custom_call.1} parent=1 // pred_fallthru
      _
    // Predicated region
    $region86: #{tpu_custom_call.1} parent=1 // pred_check
      _
    $region87: #{tpu_custom_call.1} parent=1 // pred_check_branch
      %181 = sbr.rel (0) target = $region89
    $region88: #{tpu_custom_call.1} parent=1 // pred_region
      %182 = dma.done [#allocation6], 256
    $region89: #{tpu_custom_call.1} parent=1 // pred_fallthru
      _
    // Predicated region
    $region90: #{tpu_custom_call.1} parent=1 // pred_check
      _
    $region91: #{tpu_custom_call.1} parent=1 // pred_check_branch
      %184 = sbr.rel (0) target = $region93
    $region92: #{tpu_custom_call.1} parent=1 // pred_region
      %185 = dma.done [#allocation9], 16
    $region93: #{tpu_custom_call.1} parent=1 // pred_fallthru
      _
    // Predicated region
    $region94: #{tpu_custom_call.1} parent=1 // pred_check
      _
    $region95: #{tpu_custom_call.1} parent=1 // pred_check_branch
      %187 = sbr.rel (0) target = $region97
    $region96: #{tpu_custom_call.1} parent=1 // pred_region
      %188 = dma.done [#allocation9], 512
    $region97: #{tpu_custom_call.1} parent=1 // pred_fallthru
      _
    // Predicated region
    $region98: #{tpu_custom_call.1} parent=1 // pred_check
      _
    $region99: #{tpu_custom_call.1} parent=1 // pred_check_branch
      %190 = sbr.rel (0) target = $region101
    $region100: #{tpu_custom_call.1} parent=1 // pred_region
      %191 = dma.done [#allocation12], 256
    $region101: #{tpu_custom_call.1} parent=1 // pred_fallthru
      _
    // Predicated region
    $region102: #{tpu_custom_call.1} parent=1 // pred_check
      _
    $region103: #{tpu_custom_call.1} parent=1 // pred_check_branch
      %193 = sbr.rel (0) target = $region105
    $region104: #{tpu_custom_call.1} parent=1 // pred_region
      %194 = dma.done [#allocation12], 16
    $region105: #{tpu_custom_call.1} parent=1 // pred_fallthru
      _
    // Predicated region
    $region106: #{tpu_custom_call.1} parent=1 // pred_check
      _
    $region107: #{tpu_custom_call.1} parent=1 // pred_check_branch
      %196 = sbr.rel (0) target = $region109
    $region108: #{tpu_custom_call.1} parent=1 // pred_region
      %197 = dma.done [#allocation15], 16
    $region109: #{tpu_custom_call.1} parent=1 // pred_fallthru
      _
    // Predicated region
    $region110: #{tpu_custom_call.1} parent=1 // pred_check
      _
    $region111: #{tpu_custom_call.1} parent=1 // pred_check_branch
      %199 = sbr.rel (0) target = $region113
    $region112: #{tpu_custom_call.1} parent=1 // pred_region
      %200 = dma.done [#allocation15], 16
    $region113: #{tpu_custom_call.1} parent=1 // pred_fallthru
      _
    // Predicated region
    $region114: #{tpu_custom_call.1} parent=1 // pred_check
      _
    $region115: #{tpu_custom_call.1} parent=1 // pred_check_branch
      %202 = sbr.rel (0) target = $region117
    $region116: #{tpu_custom_call.1} parent=1 // pred_region
      %203 = dma.done [#allocation18], 16
    $region117: #{tpu_custom_call.1} parent=1 // pred_fallthru
      _
    // Predicated region
    $region118: #{tpu_custom_call.1} parent=1 // pred_check
      _
    $region119: #{tpu_custom_call.1} parent=1 // pred_check_branch
      %205 = sbr.rel (0) target = $region121
    $region120: #{tpu_custom_call.1} parent=1 // pred_region
      %206 = dma.done [#allocation18], 256
    $region121: #{tpu_custom_call.1} parent=1 // pred_fallthru
      _
    %v208 = vld [vmem:[#allocation2] sm:$0xff]
    %v209 = vld [vmem:[#allocation2 + $0x8] sm:$0xff]
    %v210 = vld [vmem:[%s1] sm:$0xff]
    %v211 = vld [vmem:[%s1 + $0x8] sm:$0xff]
    %v212 = vld [vmem:[%s2] sm:$0xff]
    %v213 = vld [vmem:[%s2 + $0x8] sm:$0xff]
    %v214 = vld [vmem:[#allocation5] sm:$0xff]
    %v215 = vld [vmem:[#allocation5 + $0x8] sm:$0xff]
    %v216 = vld [vmem:[#allocation5 + $0x10] sm:$0xff]
    %v217 = vld [vmem:[#allocation5 + $0x18] sm:$0xff]
    %v218 = vld [vmem:[#allocation5 + $0x20] sm:$0xff]
    %v219 = vld [vmem:[#allocation5 + $0x28] sm:$0xff]
    %v220 = vld [vmem:[#allocation5 + $0x30] sm:$0xff]
    %v221 = vld [vmem:[#allocation5 + $0x38] sm:$0xff]
    %v222 = vld [vmem:[#allocation5 + $0x40] sm:$0xff]
    %v223 = vld [vmem:[#allocation5 + $0x48] sm:$0xff]
    %v224 = vld [vmem:[#allocation5 + $0x50] sm:$0xff]
    %v225 = vld [vmem:[#allocation5 + $0x58] sm:$0xff]
    %v226 = vld [vmem:[#allocation5 + $0x60] sm:$0xff]
    %v227 = vld [vmem:[#allocation5 + $0x68] sm:$0xff]
    %v228 = vld [vmem:[#allocation5 + $0x70] sm:$0xff]
    %v229 = vld [vmem:[#allocation5 + $0x78] sm:$0xff]
    %v230 = vld [vmem:[#allocation7] sm:$0xff]
    %v231 = vld [vmem:[#allocation7 + $0x8] sm:$0xff]
    %v232 = vld [vmem:[%s4] sm:$0xff]
    %v233 = vld [vmem:[%s4 + $0x8] sm:$0xff]
    %s234 = scalar_lea.vmem %s4, 16
    %v235 = vld [vmem:[%s234] sm:$0xff]
    %v236 = vld [vmem:[%s234 + $0x8] sm:$0xff]
    %238 = vset.pattern.permute.xlu0 0
    %239 = vperm.xlu0 %238, %v212
    %v240 = vpop.permute.xlu0 %239
    %243 = vset.pattern.permute.xlu0 0
    %244 = vperm.xlu0 %243, %v213
    %v245 = vpop.permute.xlu0 %244
    %v247 = vmul.f32 %v232, %v240
    %v248 = vmul.f32 %v233, %v245
    %249 = vset.pattern.permute.xlu0 1
    %250 = vperm.xlu0 %249, %v212
    %v251 = vpop.permute.xlu0 %250
    %253 = vset.pattern.permute.xlu0 1
    %254 = vperm.xlu0 %253, %v213
    %v255 = vpop.permute.xlu0 %254
    %v257 = vmul.f32 %v235, %v251
    %v258 = vmul.f32 %v236, %v255
    %v259 = vadd.f32 %v247, %v257
    %v260 = vadd.f32 %v248, %v258
    %263 = vrot.lane.b32.xlu0 %v259, 32
    %v264 = vpop.permute.xlu0 %263
    %265 = vrot.lane.b32.xlu0 %v260, 32
    %v266 = vpop.permute.xlu0 %265
    %vm269 = vcmask 261120
    %v270 = vsel %vm269, %v208, %v264
    %v271 = vsel %vm269, %v209, %v266
    %v272 = vld [vmem:[#allocation10] sm:$0xf]
    %v273 = vld [vmem:[#allocation10 + $0x4] sm:$0xf]
    %v274 = vld [vmem:[#allocation10 + $0x8] sm:$0xf]
    %v275 = vld [vmem:[#allocation10 + $0xc] sm:$0xf]
    %v276 = vld [vmem:[#allocation10 + $0x10] sm:$0xf]
    %v277 = vld [vmem:[#allocation10 + $0x14] sm:$0xf]
    %v278 = vld [vmem:[#allocation10 + $0x18] sm:$0xf]
    %v279 = vld [vmem:[#allocation10 + $0x1c] sm:$0xf]
    %v280 = vpack.c.bf16 %v271, %v270
    %v281 = vld [vmem:[#allocation13] sm:$0x1]
    %v283 = vlaneseq
    %v284 = vshrl.u32 %v283, 7
    %v285 = vsub.s32 0, %v284
    %v286 = vrot.slane %v281, %v285
    %v296 = vunpack.c.l.b16 %v272
    %v297 = vunpack.c.l.b16 %v273
    %v298 = vunpack.c.l.b16 %v274
    %v299 = vunpack.c.l.b16 %v275
    %v300 = vunpack.c.l.b16 %v276
    %v301 = vunpack.c.l.b16 %v277
    %v302 = vunpack.c.l.b16 %v278
    %v303 = vunpack.c.l.b16 %v279
    %v304 = vpack.c.b16 %v297, %v296
    %v305 = vpack.c.b16 %v299, %v298
    %v306 = vpack.c.b16 %v301, %v300
    %v307 = vpack.c.b16 %v303, %v302
    %vm312 = vcmask 523264
    %v314 = vsel %vm312, %v280, 0
    %316 = vmatprep.subr.bf16.mxu0 0
    %317 = vmatpush1.bf16.msra.mxu0 %v304
    %318 = vmatprep.subr.bf16.mxu0 0
    %319 = vmatpush1.bf16.msra.mxu0 %v305
    %320 = vmatprep.subr.bf16.mxu0 0
    %321 = vmatpush1.bf16.msra.mxu0 %v306
    %322 = vmatprep.subr.bf16.mxu0 0
    %323 = vmatpush1.bf16.msra.mxu0 %v307
    %324 = vmatprep.subr.bf16.mxu0 0
    %325 = vmatpush1.bf16.msra.mxu0 0
    %326 = vmatprep.subr.bf16.mxu0 0
    %327 = vmatpush1.bf16.msra.mxu0 0
    %328 = vmatprep.subr.bf16.mxu0 0
    %329 = vmatpush1.bf16.msra.mxu0 0
    %330 = vmatprep.subr.bf16.mxu0 0
    %331 = vmatpush1.bf16.msra.mxu0 0
    %332 = vmatprep.subr.bf16.mxu0 0
    %333 = vmatpush1.bf16.msra.mxu0 0
    %334 = vmatprep.subr.bf16.mxu0 0
    %335 = vmatpush1.bf16.msra.mxu0 0
    %336 = vmatprep.subr.bf16.mxu0 0
    %337 = vmatpush1.bf16.msra.mxu0 0
    %338 = vmatprep.subr.bf16.mxu0 0
    %339 = vmatpush1.bf16.msra.mxu0 0
    %340 = vmatprep.subr.bf16.mxu0 0
    %341 = vmatpush1.bf16.msra.mxu0 0
    %342 = vmatprep.subr.bf16.mxu0 0
    %343 = vmatpush1.bf16.msra.mxu0 0
    %344 = vmatprep.subr.bf16.mxu0 0
    %345 = vmatpush1.bf16.msra.mxu0 0
    %346 = vmatprep.subr.bf16.mxu0 0
    %347 = vmatpush1.bf16.msra.mxu0 0
    %348 = vmatprep.mubr.bf16.mxu0 0
    %349 = vmatmul.mubr.bf16.gmra.mrb[0].mxu0 %v314
    %v350 = vpop.f32.mrb[0].mxu0
    %v351 = vadd.f32 %v286, %v350
    %v352 = vpop.f32.mrb[0].mxu0
    %v353 = vpop.f32.mrb[0].mxu0
    %v354 = vadd.f32 %v286, %v353
    %v355 = vpop.f32.mrb[0].mxu0
    %356 = vdwg.mxu0
    %v357 = vld [vmem:[#allocation11] sm:$0xf]
    %v358 = vld [vmem:[#allocation11 + $0x4] sm:$0xf]
    %v359 = vld [vmem:[#allocation11 + $0x8] sm:$0xf]
    %v360 = vld [vmem:[#allocation11 + $0xc] sm:$0xf]
    %v361 = vpack.c.bf16 %v214, %v214
    %v362 = vpack.c.bf16 %v215, %v215
    %v363 = vpack.c.bf16 %v216, %v216
    %v364 = vpack.c.bf16 %v217, %v217
    %v365 = vpack.c.bf16 %v218, %v218
    %v366 = vpack.c.bf16 %v219, %v219
    %v367 = vpack.c.bf16 %v220, %v220
    %v368 = vpack.c.bf16 %v221, %v221
    %v369 = vpack.c.bf16 %v222, %v222
    %v370 = vpack.c.bf16 %v223, %v223
    %v371 = vpack.c.bf16 %v224, %v224
    %v372 = vpack.c.bf16 %v225, %v225
    %v373 = vpack.c.bf16 %v226, %v226
    %v374 = vpack.c.bf16 %v227, %v227
    %v375 = vpack.c.bf16 %v228, %v228
    %v376 = vpack.c.bf16 %v229, %v229
    %v393 = vunpack.c.l.b16 %v361
    %v394 = vunpack.c.l.b16 %v362
    %v395 = vunpack.c.l.b16 %v363
    %v396 = vunpack.c.l.b16 %v364
    %v397 = vunpack.c.l.b16 %v365
    %v398 = vunpack.c.l.b16 %v366
    %v399 = vunpack.c.l.b16 %v367
    %v400 = vunpack.c.l.b16 %v368
    %v401 = vunpack.c.l.b16 %v369
    %v402 = vunpack.c.l.b16 %v370
    %v403 = vunpack.c.l.b16 %v371
    %v404 = vunpack.c.l.b16 %v372
    %v405 = vunpack.c.l.b16 %v373
    %v406 = vunpack.c.l.b16 %v374
    %v407 = vunpack.c.l.b16 %v375
    %v408 = vunpack.c.l.b16 %v376
    %v409 = vrot.slane %v393, 7
    %v410 = vrot.slane %v394, 6
    %vm411 = vcmask 1041409
    %v412 = vsel %vm411, %v410, %v409
    %v413 = vrot.slane %v395, 5
    %vm414 = vcmask 1042434
    %v415 = vsel %vm414, %v413, %v412
    %v416 = vrot.slane %v396, 4
    %vm417 = vcmask 1043459
    %v418 = vsel %vm417, %v416, %v415
    %v419 = vrot.slane %v397, 3
    %vm420 = vcmask 1044484
    %v421 = vsel %vm420, %v419, %v418
    %v422 = vrot.slane %v398, 2
    %vm423 = vcmask 1045509
    %v424 = vsel %vm423, %v422, %v421
    %v425 = vrot.slane %v399, 1
    %vm426 = vcmask 1046534
    %v427 = vsel %vm426, %v425, %v424
    %vm428 = vcmask 1047559
    %v429 = vsel %vm428, %v400, %v427
    %v430 = vrot.slane %v401, 7
    %v431 = vrot.slane %v402, 6
    %v432 = vsel %vm411, %v431, %v430
    %v433 = vrot.slane %v403, 5
    %v434 = vsel %vm414, %v433, %v432
    %v435 = vrot.slane %v404, 4
    %v436 = vsel %vm417, %v435, %v434
    %v437 = vrot.slane %v405, 3
    %v438 = vsel %vm420, %v437, %v436
    %v439 = vrot.slane %v406, 2
    %v440 = vsel %vm423, %v439, %v438
    %v441 = vrot.slane %v407, 1
    %v442 = vsel %vm426, %v441, %v440
    %v443 = vsel %vm428, %v408, %v442
    %v444 = vpack.c.b16 %v443, %v429
    %v449 = vunpack.c.l.b16 %v357
    %v450 = vunpack.c.l.b16 %v358
    %v451 = vunpack.c.l.b16 %v359
    %v452 = vunpack.c.l.b16 %v360
    %v453 = vpack.c.b16 %v450, %v449
    %v454 = vpack.c.b16 %v452, %v451
    %v458 = vsel %vm269, %v444, 0
    %460 = vmatprep.subr.bf16.mxu0 0
    %461 = vmatpush1.bf16.msra.mxu0 %v453
    %462 = vmatprep.subr.bf16.mxu0 0
    %463 = vmatpush1.bf16.msra.mxu0 %v454
    %464 = vmatprep.subr.bf16.mxu0 0
    %465 = vmatpush1.bf16.msra.mxu0 0
    %466 = vmatprep.subr.bf16.mxu0 0
    %467 = vmatpush1.bf16.msra.mxu0 0
    %468 = vmatprep.subr.bf16.mxu0 0
    %469 = vmatpush1.bf16.msra.mxu0 0
    %470 = vmatprep.subr.bf16.mxu0 0
    %471 = vmatpush1.bf16.msra.mxu0 0
    %472 = vmatprep.subr.bf16.mxu0 0
    %473 = vmatpush1.bf16.msra.mxu0 0
    %474 = vmatprep.subr.bf16.mxu0 0
    %475 = vmatpush1.bf16.msra.mxu0 0
    %476 = vmatprep.subr.bf16.mxu0 0
    %477 = vmatpush1.bf16.msra.mxu0 0
    %478 = vmatprep.subr.bf16.mxu0 0
    %479 = vmatpush1.bf16.msra.mxu0 0
    %480 = vmatprep.subr.bf16.mxu0 0
    %481 = vmatpush1.bf16.msra.mxu0 0
    %482 = vmatprep.subr.bf16.mxu0 0
    %483 = vmatpush1.bf16.msra.mxu0 0
    %484 = vmatprep.subr.bf16.mxu0 0
    %485 = vmatpush1.bf16.msra.mxu0 0
    %486 = vmatprep.subr.bf16.mxu0 0
    %487 = vmatpush1.bf16.msra.mxu0 0
    %488 = vmatprep.subr.bf16.mxu0 0
    %489 = vmatpush1.bf16.msra.mxu0 0
    %490 = vmatprep.subr.bf16.mxu0 0
    %491 = vmatpush1.bf16.msra.mxu0 0
    %492 = vmatprep.mubr.bf16.mxu0 0
    %493 = vmatmul.mubr.bf16.gmra.mrb[0].mxu0 %v458
    %v494 = vpop.f32.mrb[0].mxu0
    %v495 = vadd.f32 0.0, %v494
    %v496 = vpop.f32.mrb[0].mxu0
    %v497 = vpop.f32.mrb[0].mxu0
    %v498 = vadd.f32 0.0, %v497
    %v499 = vpop.f32.mrb[0].mxu0
    %500 = vdwg.mxu0
    %v501 = vld [vmem:[#allocation14] sm:$0x1]
    %v502 = vadd.f32 %v351, %v495
    %v503 = vadd.f32 %v354, %v498
    %v504 = vxor.u32 %v502, 2147483648
    %v505 = vxor.u32 %v503, 2147483648
    %v506 = vmul.f32 %v504, 1.442695
    %v507 = vpow.pop %v506
    %v508 = vmul.f32 %v505, 1.442695
    %v509 = vpow.pop %v508
    %v510 = vadd.f32 %v507, 1.0
    %v511 = vadd.f32 %v509, 1.0
    %v512 = vrcp.pop %v510
    %v513 = vmul.f32 1.0, %v512
    %v514 = vrcp.pop %v511
    %v515 = vmul.f32 1.0, %v514
    %v517 = vlaneseq
    %v518 = vshrl.u32 %v517, 7
    %v519 = vsub.s32 0, %v518
    %v520 = vrot.slane %v501, %v519
    %521 = vrot.lane.b32.xlu0 %v520, 64
    %v522 = vpop.permute.xlu0 %521
    %v524 = vadd.f32 %v495, %v522
    %v525 = vadd.f32 %v498, %v522
    %528 = vrot.lane.b32.xlu0 %v524, 64
    %v529 = vpop.permute.xlu0 %528
    %530 = vrot.lane.b32.xlu0 %v525, 64
    %v531 = vpop.permute.xlu0 %530
    %v534 = vmul.f32 %v513, %v529
    %v535 = vmul.f32 %v515, %v531
    %538 = vrot.lane.b32.xlu0 %v534, 64
    %v539 = vpop.permute.xlu0 %538
    %540 = vrot.lane.b32.xlu0 %v535, 64
    %v541 = vpop.permute.xlu0 %540
    %v544 = vadd.f32 %v351, %v539
    %v545 = vadd.f32 %v354, %v541
    %v546 = vtanh.pop %v544
    %v547 = vtanh.pop %v545
    %v548 = vsub.f32 1.0, %v513
    %v549 = vsub.f32 1.0, %v515
    %552 = vrot.lane.b32.xlu0 %v546, 96
    %v553 = vpop.permute.xlu0 %552
    %554 = vrot.lane.b32.xlu0 %v547, 96
    %v555 = vpop.permute.xlu0 %554
    %v558 = vmul.f32 %v548, %v553
    %v559 = vmul.f32 %v549, %v555
    %v576 = vrot.slane %v214, 7
    %v577 = vrot.slane %v215, 6
    %v578 = vsel %vm411, %v577, %v576
    %v579 = vrot.slane %v216, 5
    %v580 = vsel %vm414, %v579, %v578
    %v581 = vrot.slane %v217, 4
    %v582 = vsel %vm417, %v581, %v580
    %v583 = vrot.slane %v218, 3
    %v584 = vsel %vm420, %v583, %v582
    %v585 = vrot.slane %v219, 2
    %v586 = vsel %vm423, %v585, %v584
    %v587 = vrot.slane %v220, 1
    %v588 = vsel %vm426, %v587, %v586
    %v589 = vsel %vm428, %v221, %v588
    %v590 = vrot.slane %v222, 7
    %v591 = vrot.slane %v223, 6
    %v592 = vsel %vm411, %v591, %v590
    %v593 = vrot.slane %v224, 5
    %v594 = vsel %vm414, %v593, %v592
    %v595 = vrot.slane %v225, 4
    %v596 = vsel %vm417, %v595, %v594
    %v597 = vrot.slane %v226, 3
    %v598 = vsel %vm420, %v597, %v596
    %v599 = vrot.slane %v227, 2
    %v600 = vsel %vm423, %v599, %v598
    %v601 = vrot.slane %v228, 1
    %v602 = vsel %vm426, %v601, %v600
    %v603 = vsel %vm428, %v229, %v602
    %604 = vrot.lane.b32.xlu0 %v589, 32
    %v605 = vpop.permute.xlu0 %604
    %606 = vrot.lane.b32.xlu0 %v603, 32
    %v607 = vpop.permute.xlu0 %606
    %v610 = vmul.f32 %v513, %v605
    %v611 = vmul.f32 %v515, %v607
    %v612 = vadd.f32 %v558, %v610
    %v613 = vadd.f32 %v559, %v611
    %616 = vrot.lane.b32.xlu0 %v612, 96
    %v617 = vpop.permute.xlu0 %616
    %618 = vrot.lane.b32.xlu0 %v613, 96
    %v619 = vpop.permute.xlu0 %618
    %622 = vst.msk [vmem:[#allocation20] sm:$0xff] %vm269, %v617
    %623 = vst.msk [vmem:[#allocation20 + $0x8] sm:$0xff] %vm269, %v619
    %v624 = vld [vmem:[#allocation8] sm:$0x1]
    %v626 = vlaneseq
    %v627 = vshrl.u32 %v626, 7
    %v628 = vsub.s32 0, %v627
    %v629 = vrot.slane %v624, %v628
    %v631 = vmul.f32 %v214, %v629
    %v632 = vmul.f32 %v215, %v629
    %v633 = vmul.f32 %v216, %v629
    %v634 = vmul.f32 %v217, %v629
    %v635 = vmul.f32 %v218, %v629
    %v636 = vmul.f32 %v219, %v629
    %v637 = vmul.f32 %v220, %v629
    %v638 = vmul.f32 %v221, %v629
    %v639 = vmul.f32 %v222, %v629
    %v640 = vmul.f32 %v223, %v629
    %v641 = vmul.f32 %v224, %v629
    %v642 = vmul.f32 %v225, %v629
    %v643 = vmul.f32 %v226, %v629
    %v644 = vmul.f32 %v227, %v629
    %v645 = vmul.f32 %v228, %v629
    %v646 = vmul.f32 %v229, %v629
    %v647 = vsel %vm269, %v631, 0.0
    %648 = vadd.xlane.f32.xlu0 %v647
    %v649 = vpop.xlane.xlu0 %648
    %v650 = vsel %vm269, %v632, 0.0
    %651 = vadd.xlane.f32.xlu0 %v650
    %v652 = vpop.xlane.xlu0 %651
    %v653 = vsel %vm269, %v633, 0.0
    %654 = vadd.xlane.f32.xlu0 %v653
    %v655 = vpop.xlane.xlu0 %654
    %v656 = vsel %vm269, %v634, 0.0
    %657 = vadd.xlane.f32.xlu0 %v656
    %v658 = vpop.xlane.xlu0 %657
    %v659 = vsel %vm269, %v635, 0.0
    %660 = vadd.xlane.f32.xlu0 %v659
    %v661 = vpop.xlane.xlu0 %660
    %v662 = vsel %vm269, %v636, 0.0
    %663 = vadd.xlane.f32.xlu0 %v662
    %v664 = vpop.xlane.xlu0 %663
    %v665 = vsel %vm269, %v637, 0.0
    %666 = vadd.xlane.f32.xlu0 %v665
    %v667 = vpop.xlane.xlu0 %666
    %v668 = vsel %vm269, %v638, 0.0
    %669 = vadd.xlane.f32.xlu0 %v668
    %v670 = vpop.xlane.xlu0 %669
    %v671 = vsel %vm269, %v639, 0.0
    %672 = vadd.xlane.f32.xlu0 %v671
    %v673 = vpop.xlane.xlu0 %672
    %v674 = vsel %vm269, %v640, 0.0
    %675 = vadd.xlane.f32.xlu0 %v674
    %v676 = vpop.xlane.xlu0 %675
    %v677 = vsel %vm269, %v641, 0.0
    %678 = vadd.xlane.f32.xlu0 %v677
    %v679 = vpop.xlane.xlu0 %678
    %v680 = vsel %vm269, %v642, 0.0
    %681 = vadd.xlane.f32.xlu0 %v680
    %v682 = vpop.xlane.xlu0 %681
    %v683 = vsel %vm269, %v643, 0.0
    %684 = vadd.xlane.f32.xlu0 %v683
    %v685 = vpop.xlane.xlu0 %684
    %v686 = vsel %vm269, %v644, 0.0
    %687 = vadd.xlane.f32.xlu0 %v686
    %v688 = vpop.xlane.xlu0 %687
    %v689 = vsel %vm269, %v645, 0.0
    %690 = vadd.xlane.f32.xlu0 %v689
    %v691 = vpop.xlane.xlu0 %690
    %v692 = vsel %vm269, %v646, 0.0
    %693 = vadd.xlane.f32.xlu0 %v692
    %v694 = vpop.xlane.xlu0 %693
    %v711 = vlaneseq
    %v712 = vand.u32 %v711, 127
    %v713 = vlaneseq
    %v714 = vshrl.u32 %v713, 7
    %v715 = vsub.s32 %v712, %v714
    %v716 = vrot.slane %v649, %v715
    %v717 = vlaneseq
    %v718 = vshrl.u32 %v717, 7
    %v719 = vsub.s32 %v712, %v718
    %v720 = vrot.slane %v652, %v719
    %v721 = vlaneseq
    %v722 = vshrl.u32 %v721, 7
    %v723 = vsub.s32 %v712, %v722
    %v724 = vrot.slane %v655, %v723
    %v725 = vlaneseq
    %v726 = vshrl.u32 %v725, 7
    %v727 = vsub.s32 %v712, %v726
    %v728 = vrot.slane %v658, %v727
    %v729 = vlaneseq
    %v730 = vshrl.u32 %v729, 7
    %v731 = vsub.s32 %v712, %v730
    %v732 = vrot.slane %v661, %v731
    %v733 = vlaneseq
    %v734 = vshrl.u32 %v733, 7
    %v735 = vsub.s32 %v712, %v734
    %v736 = vrot.slane %v664, %v735
    %v737 = vlaneseq
    %v738 = vshrl.u32 %v737, 7
    %v739 = vsub.s32 %v712, %v738
    %v740 = vrot.slane %v667, %v739
    %v741 = vlaneseq
    %v742 = vshrl.u32 %v741, 7
    %v743 = vsub.s32 %v712, %v742
    %v744 = vrot.slane %v670, %v743
    %v745 = vlaneseq
    %v746 = vshrl.u32 %v745, 7
    %v747 = vsub.s32 %v712, %v746
    %v748 = vrot.slane %v673, %v747
    %v749 = vlaneseq
    %v750 = vshrl.u32 %v749, 7
    %v751 = vsub.s32 %v712, %v750
    %v752 = vrot.slane %v676, %v751
    %v753 = vlaneseq
    %v754 = vshrl.u32 %v753, 7
    %v755 = vsub.s32 %v712, %v754
    %v756 = vrot.slane %v679, %v755
    %v757 = vlaneseq
    %v758 = vshrl.u32 %v757, 7
    %v759 = vsub.s32 %v712, %v758
    %v760 = vrot.slane %v682, %v759
    %v761 = vlaneseq
    %v762 = vshrl.u32 %v761, 7
    %v763 = vsub.s32 %v712, %v762
    %v764 = vrot.slane %v685, %v763
    %v765 = vlaneseq
    %v766 = vshrl.u32 %v765, 7
    %v767 = vsub.s32 %v712, %v766
    %v768 = vrot.slane %v688, %v767
    %v769 = vlaneseq
    %v770 = vshrl.u32 %v769, 7
    %v771 = vsub.s32 %v712, %v770
    %v772 = vrot.slane %v691, %v771
    %v773 = vlaneseq
    %v774 = vshrl.u32 %v773, 7
    %v775 = vsub.s32 %v712, %v774
    %v776 = vrot.slane %v694, %v775
    %v777 = vsel %vm411, %v720, %v716
    %v778 = vsel %vm414, %v724, %v777
    %v779 = vsel %vm417, %v728, %v778
    %v780 = vsel %vm420, %v732, %v779
    %v781 = vsel %vm423, %v736, %v780
    %v782 = vsel %vm426, %v740, %v781
    %v783 = vsel %vm428, %v744, %v782
    %v784 = vsel %vm411, %v752, %v748
    %v785 = vsel %vm414, %v756, %v784
    %v786 = vsel %vm417, %v760, %v785
    %v787 = vsel %vm420, %v764, %v786
    %v788 = vsel %vm423, %v768, %v787
    %v789 = vsel %vm426, %v772, %v788
    %v790 = vsel %vm428, %v776, %v789
    %vm793 = vcmask 64512
    %v794 = vsel %vm793, %v783, -inf
    %795 = vmax.xlane.f32.xlu0 %v794
    %v796 = vpop.xlane.xlu0 %795
    %v797 = vsel %vm793, %v790, -inf
    %798 = vmax.xlane.f32.xlu0 %v797
    %v799 = vpop.xlane.xlu0 %798
    %v802 = vlaneseq
    %v803 = vshrl.u32 %v802, 7
    %v804 = vsub.s32 0, %v803
    %v805 = vrot.slane %v796, %v804
    %v806 = vlaneseq
    %v807 = vshrl.u32 %v806, 7
    %v808 = vsub.s32 1, %v807
    %v809 = vrot.slane %v796, %v808
    %v810 = vlaneseq
    %v811 = vshrl.u32 %v810, 7
    %v812 = vsub.s32 2, %v811
    %v813 = vrot.slane %v796, %v812
    %v814 = vlaneseq
    %v815 = vshrl.u32 %v814, 7
    %v816 = vsub.s32 3, %v815
    %v817 = vrot.slane %v796, %v816
    %v818 = vlaneseq
    %v819 = vshrl.u32 %v818, 7
    %v820 = vsub.s32 4, %v819
    %v821 = vrot.slane %v796, %v820
    %v822 = vlaneseq
    %v823 = vshrl.u32 %v822, 7
    %v824 = vsub.s32 5, %v823
    %v825 = vrot.slane %v796, %v824
    %v826 = vlaneseq
    %v827 = vshrl.u32 %v826, 7
    %v828 = vsub.s32 6, %v827
    %v829 = vrot.slane %v796, %v828
    %v830 = vlaneseq
    %v831 = vshrl.u32 %v830, 7
    %v832 = vsub.s32 7, %v831
    %v833 = vrot.slane %v796, %v832
    %v834 = vlaneseq
    %v835 = vshrl.u32 %v834, 7
    %v836 = vsub.s32 0, %v835
    %v837 = vrot.slane %v799, %v836
    %v838 = vlaneseq
    %v839 = vshrl.u32 %v838, 7
    %v840 = vsub.s32 1, %v839
    %v841 = vrot.slane %v799, %v840
    %v842 = vlaneseq
    %v843 = vshrl.u32 %v842, 7
    %v844 = vsub.s32 2, %v843
    %v845 = vrot.slane %v799, %v844
    %v846 = vlaneseq
    %v847 = vshrl.u32 %v846, 7
    %v848 = vsub.s32 3, %v847
    %v849 = vrot.slane %v799, %v848
    %v850 = vlaneseq
    %v851 = vshrl.u32 %v850, 7
    %v852 = vsub.s32 4, %v851
    %v853 = vrot.slane %v799, %v852
    %v854 = vlaneseq
    %v855 = vshrl.u32 %v854, 7
    %v856 = vsub.s32 5, %v855
    %v857 = vrot.slane %v799, %v856
    %v858 = vlaneseq
    %v859 = vshrl.u32 %v858, 7
    %v860 = vsub.s32 6, %v859
    %v861 = vrot.slane %v799, %v860
    %v862 = vlaneseq
    %v863 = vshrl.u32 %v862, 7
    %v864 = vsub.s32 7, %v863
    %v865 = vrot.slane %v799, %v864
    %v882 = vsub.f32 %v649, %v805
    %v883 = vsub.f32 %v652, %v809
    %v884 = vsub.f32 %v655, %v813
    %v885 = vsub.f32 %v658, %v817
    %v886 = vsub.f32 %v661, %v821
    %v887 = vsub.f32 %v664, %v825
    %v888 = vsub.f32 %v667, %v829
    %v889 = vsub.f32 %v670, %v833
    %v890 = vsub.f32 %v673, %v837
    %v891 = vsub.f32 %v676, %v841
    %v892 = vsub.f32 %v679, %v845
    %v893 = vsub.f32 %v682, %v849
    %v894 = vsub.f32 %v685, %v853
    %v895 = vsub.f32 %v688, %v857
    %v896 = vsub.f32 %v691, %v861
    %v897 = vsub.f32 %v694, %v865
    %v898 = vmul.f32 %v882, 1.442695
    %v899 = vpow.pop %v898
    %v900 = vmul.f32 %v883, 1.442695
    %v901 = vpow.pop %v900
    %v902 = vmul.f32 %v884, 1.442695
    %v903 = vpow.pop %v902
    %v904 = vmul.f32 %v885, 1.442695
    %v905 = vpow.pop %v904
    %v906 = vmul.f32 %v886, 1.442695
    %v907 = vpow.pop %v906
    %v908 = vmul.f32 %v887, 1.442695
    %v909 = vpow.pop %v908
    %v910 = vmul.f32 %v888, 1.442695
    %v911 = vpow.pop %v910
    %v912 = vmul.f32 %v889, 1.442695
    %v913 = vpow.pop %v912
    %v914 = vmul.f32 %v890, 1.442695
    %v915 = vpow.pop %v914
    %v916 = vmul.f32 %v891, 1.442695
    %v917 = vpow.pop %v916
    %v918 = vmul.f32 %v892, 1.442695
    %v919 = vpow.pop %v918
    %v920 = vmul.f32 %v893, 1.442695
    %v921 = vpow.pop %v920
    %v922 = vmul.f32 %v894, 1.442695
    %v923 = vpow.pop %v922
    %v924 = vmul.f32 %v895, 1.442695
    %v925 = vpow.pop %v924
    %v926 = vmul.f32 %v896, 1.442695
    %v927 = vpow.pop %v926
    %v928 = vmul.f32 %v897, 1.442695
    %v929 = vpow.pop %v928
    %946 = vset.pattern.permute.xlu0 0
    %947 = vperm.xlu0 %946, %v899
    %v948 = vpop.permute.xlu0 %947
    %949 = vset.pattern.permute.xlu0 0
    %950 = vperm.xlu0 %949, %v901
    %v951 = vpop.permute.xlu0 %950
    %952 = vset.pattern.permute.xlu0 0
    %953 = vperm.xlu0 %952, %v903
    %v954 = vpop.permute.xlu0 %953
    %955 = vset.pattern.permute.xlu0 0
    %956 = vperm.xlu0 %955, %v905
    %v957 = vpop.permute.xlu0 %956
    %958 = vset.pattern.permute.xlu0 0
    %959 = vperm.xlu0 %958, %v907
    %v960 = vpop.permute.xlu0 %959
    %961 = vset.pattern.permute.xlu0 0
    %962 = vperm.xlu0 %961, %v909
    %v963 = vpop.permute.xlu0 %962
    %964 = vset.pattern.permute.xlu0 0
    %965 = vperm.xlu0 %964, %v911
    %v966 = vpop.permute.xlu0 %965
    %967 = vset.pattern.permute.xlu0 0
    %968 = vperm.xlu0 %967, %v913
    %v969 = vpop.permute.xlu0 %968
    %970 = vset.pattern.permute.xlu0 0
    %971 = vperm.xlu0 %970, %v915
    %v972 = vpop.permute.xlu0 %971
    %973 = vset.pattern.permute.xlu0 0
    %974 = vperm.xlu0 %973, %v917
    %v975 = vpop.permute.xlu0 %974
    %976 = vset.pattern.permute.xlu0 0
    %977 = vperm.xlu0 %976, %v919
    %v978 = vpop.permute.xlu0 %977
    %979 = vset.pattern.permute.xlu0 0
    %980 = vperm.xlu0 %979, %v921
    %v981 = vpop.permute.xlu0 %980
    %982 = vset.pattern.permute.xlu0 0
    %983 = vperm.xlu0 %982, %v923
    %v984 = vpop.permute.xlu0 %983
    %985 = vset.pattern.permute.xlu0 0
    %986 = vperm.xlu0 %985, %v925
    %v987 = vpop.permute.xlu0 %986
    %988 = vset.pattern.permute.xlu0 0
    %989 = vperm.xlu0 %988, %v927
    %v990 = vpop.permute.xlu0 %989
    %991 = vset.pattern.permute.xlu0 0
    %992 = vperm.xlu0 %991, %v929
    %v993 = vpop.permute.xlu0 %992
    %v994 = vlaneseq
    %v995 = vshrl.u32 %v994, 7
    %v996 = vsub.s32 %v712, %v995
    %v997 = vrot.slane %v948, %v996
    %v998 = vlaneseq
    %v999 = vshrl.u32 %v998, 7
    %v1000 = vsub.s32 %v712, %v999
    %v1001 = vrot.slane %v951, %v1000
    %v1002 = vlaneseq
    %v1003 = vshrl.u32 %v1002, 7
    %v1004 = vsub.s32 %v712, %v1003
    %v1005 = vrot.slane %v954, %v1004
    %v1006 = vlaneseq
    %v1007 = vshrl.u32 %v1006, 7
    %v1008 = vsub.s32 %v712, %v1007
    %v1009 = vrot.slane %v957, %v1008
    %v1010 = vlaneseq
    %v1011 = vshrl.u32 %v1010, 7
    %v1012 = vsub.s32 %v712, %v1011
    %v1013 = vrot.slane %v960, %v1012
    %v1014 = vlaneseq
    %v1015 = vshrl.u32 %v1014, 7
    %v1016 = vsub.s32 %v712, %v1015
    %v1017 = vrot.slane %v963, %v1016
    %v1018 = vlaneseq
    %v1019 = vshrl.u32 %v1018, 7
    %v1020 = vsub.s32 %v712, %v1019
    %v1021 = vrot.slane %v966, %v1020
    %v1022 = vlaneseq
    %v1023 = vshrl.u32 %v1022, 7
    %v1024 = vsub.s32 %v712, %v1023
    %v1025 = vrot.slane %v969, %v1024
    %v1026 = vlaneseq
    %v1027 = vshrl.u32 %v1026, 7
    %v1028 = vsub.s32 %v712, %v1027
    %v1029 = vrot.slane %v972, %v1028
    %v1030 = vlaneseq
    %v1031 = vshrl.u32 %v1030, 7
    %v1032 = vsub.s32 %v712, %v1031
    %v1033 = vrot.slane %v975, %v1032
    %v1034 = vlaneseq
    %v1035 = vshrl.u32 %v1034, 7
    %v1036 = vsub.s32 %v712, %v1035
    %v1037 = vrot.slane %v978, %v1036
    %v1038 = vlaneseq
    %v1039 = vshrl.u32 %v1038, 7
    %v1040 = vsub.s32 %v712, %v1039
    %v1041 = vrot.slane %v981, %v1040
    %v1042 = vlaneseq
    %v1043 = vshrl.u32 %v1042, 7
    %v1044 = vsub.s32 %v712, %v1043
    %v1045 = vrot.slane %v984, %v1044
    %v1046 = vlaneseq
    %v1047 = vshrl.u32 %v1046, 7
    %v1048 = vsub.s32 %v712, %v1047
    %v1049 = vrot.slane %v987, %v1048
    %v1050 = vlaneseq
    %v1051 = vshrl.u32 %v1050, 7
    %v1052 = vsub.s32 %v712, %v1051
    %v1053 = vrot.slane %v990, %v1052
    %v1054 = vlaneseq
    %v1055 = vshrl.u32 %v1054, 7
    %v1056 = vsub.s32 %v712, %v1055
    %v1057 = vrot.slane %v993, %v1056
    %v1058 = vsel %vm411, %v1001, %v997
    %v1059 = vsel %vm414, %v1005, %v1058
    %v1060 = vsel %vm417, %v1009, %v1059
    %v1061 = vsel %vm420, %v1013, %v1060
    %v1062 = vsel %vm423, %v1017, %v1061
    %v1063 = vsel %vm426, %v1021, %v1062
    %v1064 = vsel %vm428, %v1025, %v1063
    %v1065 = vsel %vm411, %v1033, %v1029
    %v1066 = vsel %vm414, %v1037, %v1065
    %v1067 = vsel %vm417, %v1041, %v1066
    %v1068 = vsel %vm420, %v1045, %v1067
    %v1069 = vsel %vm423, %v1049, %v1068
    %v1070 = vsel %vm426, %v1053, %v1069
    %v1071 = vsel %vm428, %v1057, %v1070
    %v1074 = vsel %vm793, %v1064, 0.0
    %1075 = vadd.xlane.f32.xlu0 %v1074
    %v1076 = vpop.xlane.xlu0 %1075
    %v1077 = vsel %vm793, %v1071, 0.0
    %1078 = vadd.xlane.f32.xlu0 %v1077
    %v1079 = vpop.xlane.xlu0 %1078
    %v1080 = vrcp.pop %v1076
    %v1081 = vrcp.pop %v1079
    %v1084 = vlaneseq
    %v1085 = vshrl.u32 %v1084, 7
    %v1086 = vsub.s32 0, %v1085
    %v1087 = vrot.slane %v1080, %v1086
    %v1088 = vlaneseq
    %v1089 = vshrl.u32 %v1088, 7
    %v1090 = vsub.s32 1, %v1089
    %v1091 = vrot.slane %v1080, %v1090
    %v1092 = vlaneseq
    %v1093 = vshrl.u32 %v1092, 7
    %v1094 = vsub.s32 2, %v1093
    %v1095 = vrot.slane %v1080, %v1094
    %v1096 = vlaneseq
    %v1097 = vshrl.u32 %v1096, 7
    %v1098 = vsub.s32 3, %v1097
    %v1099 = vrot.slane %v1080, %v1098
    %v1100 = vlaneseq
    %v1101 = vshrl.u32 %v1100, 7
    %v1102 = vsub.s32 4, %v1101
    %v1103 = vrot.slane %v1080, %v1102
    %v1104 = vlaneseq
    %v1105 = vshrl.u32 %v1104, 7
    %v1106 = vsub.s32 5, %v1105
    %v1107 = vrot.slane %v1080, %v1106
    %v1108 = vlaneseq
    %v1109 = vshrl.u32 %v1108, 7
    %v1110 = vsub.s32 6, %v1109
    %v1111 = vrot.slane %v1080, %v1110
    %v1112 = vlaneseq
    %v1113 = vshrl.u32 %v1112, 7
    %v1114 = vsub.s32 7, %v1113
    %v1115 = vrot.slane %v1080, %v1114
    %v1116 = vlaneseq
    %v1117 = vshrl.u32 %v1116, 7
    %v1118 = vsub.s32 0, %v1117
    %v1119 = vrot.slane %v1081, %v1118
    %v1120 = vlaneseq
    %v1121 = vshrl.u32 %v1120, 7
    %v1122 = vsub.s32 1, %v1121
    %v1123 = vrot.slane %v1081, %v1122
    %v1124 = vlaneseq
    %v1125 = vshrl.u32 %v1124, 7
    %v1126 = vsub.s32 2, %v1125
    %v1127 = vrot.slane %v1081, %v1126
    %v1128 = vlaneseq
    %v1129 = vshrl.u32 %v1128, 7
    %v1130 = vsub.s32 3, %v1129
    %v1131 = vrot.slane %v1081, %v1130
    %v1132 = vlaneseq
    %v1133 = vshrl.u32 %v1132, 7
    %v1134 = vsub.s32 4, %v1133
    %v1135 = vrot.slane %v1081, %v1134
    %v1136 = vlaneseq
    %v1137 = vshrl.u32 %v1136, 7
    %v1138 = vsub.s32 5, %v1137
    %v1139 = vrot.slane %v1081, %v1138
    %v1140 = vlaneseq
    %v1141 = vshrl.u32 %v1140, 7
    %v1142 = vsub.s32 6, %v1141
    %v1143 = vrot.slane %v1081, %v1142
    %v1144 = vlaneseq
    %v1145 = vshrl.u32 %v1144, 7
    %v1146 = vsub.s32 7, %v1145
    %v1147 = vrot.slane %v1081, %v1146
    %v1164 = vmul.f32 %v899, %v1087
    %v1165 = vmul.f32 %v901, %v1091
    %v1166 = vmul.f32 %v903, %v1095
    %v1167 = vmul.f32 %v905, %v1099
    %v1168 = vmul.f32 %v907, %v1103
    %v1169 = vmul.f32 %v909, %v1107
    %v1170 = vmul.f32 %v911, %v1111
    %v1171 = vmul.f32 %v913, %v1115
    %v1172 = vmul.f32 %v915, %v1119
    %v1173 = vmul.f32 %v917, %v1123
    %v1174 = vmul.f32 %v919, %v1127
    %v1175 = vmul.f32 %v921, %v1131
    %v1176 = vmul.f32 %v923, %v1135
    %v1177 = vmul.f32 %v925, %v1139
    %v1178 = vmul.f32 %v927, %v1143
    %v1179 = vmul.f32 %v929, %v1147
    %1196 = vset.pattern.permute.xlu0 0
    %1197 = vperm.xlu0 %1196, %v1164
    %v1198 = vpop.permute.xlu0 %1197
    %1199 = vset.pattern.permute.xlu0 0
    %1200 = vperm.xlu0 %1199, %v1165
    %v1201 = vpop.permute.xlu0 %1200
    %1202 = vset.pattern.permute.xlu0 0
    %1203 = vperm.xlu0 %1202, %v1166
    %v1204 = vpop.permute.xlu0 %1203
    %1205 = vset.pattern.permute.xlu0 0
    %1206 = vperm.xlu0 %1205, %v1167
    %v1207 = vpop.permute.xlu0 %1206
    %1208 = vset.pattern.permute.xlu0 0
    %1209 = vperm.xlu0 %1208, %v1168
    %v1210 = vpop.permute.xlu0 %1209
    %1211 = vset.pattern.permute.xlu0 0
    %1212 = vperm.xlu0 %1211, %v1169
    %v1213 = vpop.permute.xlu0 %1212
    %1214 = vset.pattern.permute.xlu0 0
    %1215 = vperm.xlu0 %1214, %v1170
    %v1216 = vpop.permute.xlu0 %1215
    %1217 = vset.pattern.permute.xlu0 0
    %1218 = vperm.xlu0 %1217, %v1171
    %v1219 = vpop.permute.xlu0 %1218
    %1220 = vset.pattern.permute.xlu0 0
    %1221 = vperm.xlu0 %1220, %v1172
    %v1222 = vpop.permute.xlu0 %1221
    %1223 = vset.pattern.permute.xlu0 0
    %1224 = vperm.xlu0 %1223, %v1173
    %v1225 = vpop.permute.xlu0 %1224
    %1226 = vset.pattern.permute.xlu0 0
    %1227 = vperm.xlu0 %1226, %v1174
    %v1228 = vpop.permute.xlu0 %1227
    %1229 = vset.pattern.permute.xlu0 0
    %1230 = vperm.xlu0 %1229, %v1175
    %v1231 = vpop.permute.xlu0 %1230
    %1232 = vset.pattern.permute.xlu0 0
    %1233 = vperm.xlu0 %1232, %v1176
    %v1234 = vpop.permute.xlu0 %1233
    %1235 = vset.pattern.permute.xlu0 0
    %1236 = vperm.xlu0 %1235, %v1177
    %v1237 = vpop.permute.xlu0 %1236
    %1238 = vset.pattern.permute.xlu0 0
    %1239 = vperm.xlu0 %1238, %v1178
    %v1240 = vpop.permute.xlu0 %1239
    %1241 = vset.pattern.permute.xlu0 0
    %1242 = vperm.xlu0 %1241, %v1179
    %v1243 = vpop.permute.xlu0 %1242
    %v1244 = vlaneseq
    %v1245 = vshrl.u32 %v1244, 7
    %v1246 = vsub.s32 %v712, %v1245
    %v1247 = vrot.slane %v1198, %v1246
    %v1248 = vlaneseq
    %v1249 = vshrl.u32 %v1248, 7
    %v1250 = vsub.s32 %v712, %v1249
    %v1251 = vrot.slane %v1201, %v1250
    %v1252 = vlaneseq
    %v1253 = vshrl.u32 %v1252, 7
    %v1254 = vsub.s32 %v712, %v1253
    %v1255 = vrot.slane %v1204, %v1254
    %v1256 = vlaneseq
    %v1257 = vshrl.u32 %v1256, 7
    %v1258 = vsub.s32 %v712, %v1257
    %v1259 = vrot.slane %v1207, %v1258
    %v1260 = vlaneseq
    %v1261 = vshrl.u32 %v1260, 7
    %v1262 = vsub.s32 %v712, %v1261
    %v1263 = vrot.slane %v1210, %v1262
    %v1264 = vlaneseq
    %v1265 = vshrl.u32 %v1264, 7
    %v1266 = vsub.s32 %v712, %v1265
    %v1267 = vrot.slane %v1213, %v1266
    %v1268 = vlaneseq
    %v1269 = vshrl.u32 %v1268, 7
    %v1270 = vsub.s32 %v712, %v1269
    %v1271 = vrot.slane %v1216, %v1270
    %v1272 = vlaneseq
    %v1273 = vshrl.u32 %v1272, 7
    %v1274 = vsub.s32 %v712, %v1273
    %v1275 = vrot.slane %v1219, %v1274
    %v1276 = vlaneseq
    %v1277 = vshrl.u32 %v1276, 7
    %v1278 = vsub.s32 %v712, %v1277
    %v1279 = vrot.slane %v1222, %v1278
    %v1280 = vlaneseq
    %v1281 = vshrl.u32 %v1280, 7
    %v1282 = vsub.s32 %v712, %v1281
    %v1283 = vrot.slane %v1225, %v1282
    %v1284 = vlaneseq
    %v1285 = vshrl.u32 %v1284, 7
    %v1286 = vsub.s32 %v712, %v1285
    %v1287 = vrot.slane %v1228, %v1286
    %v1288 = vlaneseq
    %v1289 = vshrl.u32 %v1288, 7
    %v1290 = vsub.s32 %v712, %v1289
    %v1291 = vrot.slane %v1231, %v1290
    %v1292 = vlaneseq
    %v1293 = vshrl.u32 %v1292, 7
    %v1294 = vsub.s32 %v712, %v1293
    %v1295 = vrot.slane %v1234, %v1294
    %v1296 = vlaneseq
    %v1297 = vshrl.u32 %v1296, 7
    %v1298 = vsub.s32 %v712, %v1297
    %v1299 = vrot.slane %v1237, %v1298
    %v1300 = vlaneseq
    %v1301 = vshrl.u32 %v1300, 7
    %v1302 = vsub.s32 %v712, %v1301
    %v1303 = vrot.slane %v1240, %v1302
    %v1304 = vlaneseq
    %v1305 = vshrl.u32 %v1304, 7
    %v1306 = vsub.s32 %v712, %v1305
    %v1307 = vrot.slane %v1243, %v1306
    %v1308 = vsel %vm411, %v1251, %v1247
    %v1309 = vsel %vm414, %v1255, %v1308
    %v1310 = vsel %vm417, %v1259, %v1309
    %v1311 = vsel %vm420, %v1263, %v1310
    %v1312 = vsel %vm423, %v1267, %v1311
    %v1313 = vsel %vm426, %v1271, %v1312
    %v1314 = vsel %vm428, %v1275, %v1313
    %v1315 = vsel %vm411, %v1283, %v1279
    %v1316 = vsel %vm414, %v1287, %v1315
    %v1317 = vsel %vm417, %v1291, %v1316
    %v1318 = vsel %vm420, %v1295, %v1317
    %v1319 = vsel %vm423, %v1299, %v1318
    %v1320 = vsel %vm426, %v1303, %v1319
    %v1321 = vsel %vm428, %v1307, %v1320
    %1324 = vst.msk [vmem:[%s22] sm:$0xff] %vm793, %v1314
    %1325 = vst.msk [vmem:[%s22 + $0x8] sm:$0xff] %vm793, %v1321
    %v1342 = vmul.f32 %v1198, %v214
    %v1343 = vmul.f32 %v1201, %v215
    %v1344 = vmul.f32 %v1204, %v216
    %v1345 = vmul.f32 %v1207, %v217
    %v1346 = vmul.f32 %v1210, %v218
    %v1347 = vmul.f32 %v1213, %v219
    %v1348 = vmul.f32 %v1216, %v220
    %v1349 = vmul.f32 %v1219, %v221
    %v1350 = vmul.f32 %v1222, %v222
    %v1351 = vmul.f32 %v1225, %v223
    %v1352 = vmul.f32 %v1228, %v224
    %v1353 = vmul.f32 %v1231, %v225
    %v1354 = vmul.f32 %v1234, %v226
    %v1355 = vmul.f32 %v1237, %v227
    %v1356 = vmul.f32 %v1240, %v228
    %v1357 = vmul.f32 %v1243, %v229
    %v1358 = vsel %vm269, %v1342, 0.0
    %v1359 = vrot.slane %v1358, 4
    %v1360 = vadd.f32 %v1358, %v1359
    %v1361 = vrot.slane %v1360, 2
    %v1362 = vadd.f32 %v1360, %v1361
    %v1363 = vrot.slane %v1362, 1
    %v1364 = vadd.f32 %v1362, %v1363
    %v1365 = vsel %vm269, %v1343, 0.0
    %v1366 = vrot.slane %v1365, 4
    %v1367 = vadd.f32 %v1365, %v1366
    %v1368 = vrot.slane %v1367, 2
    %v1369 = vadd.f32 %v1367, %v1368
    %v1370 = vrot.slane %v1369, 1
    %v1371 = vadd.f32 %v1369, %v1370
    %v1372 = vsel %vm269, %v1344, 0.0
    %v1373 = vrot.slane %v1372, 4
    %v1374 = vadd.f32 %v1372, %v1373
    %v1375 = vrot.slane %v1374, 2
    %v1376 = vadd.f32 %v1374, %v1375
    %v1377 = vrot.slane %v1376, 1
    %v1378 = vadd.f32 %v1376, %v1377
    %v1379 = vsel %vm269, %v1345, 0.0
    %v1380 = vrot.slane %v1379, 4
    %v1381 = vadd.f32 %v1379, %v1380
    %v1382 = vrot.slane %v1381, 2
    %v1383 = vadd.f32 %v1381, %v1382
    %v1384 = vrot.slane %v1383, 1
    %v1385 = vadd.f32 %v1383, %v1384
    %v1386 = vsel %vm269, %v1346, 0.0
    %v1387 = vrot.slane %v1386, 4
    %v1388 = vadd.f32 %v1386, %v1387
    %v1389 = vrot.slane %v1388, 2
    %v1390 = vadd.f32 %v1388, %v1389
    %v1391 = vrot.slane %v1390, 1
    %v1392 = vadd.f32 %v1390, %v1391
    %v1393 = vsel %vm269, %v1347, 0.0
    %v1394 = vrot.slane %v1393, 4
    %v1395 = vadd.f32 %v1393, %v1394
    %v1396 = vrot.slane %v1395, 2
    %v1397 = vadd.f32 %v1395, %v1396
    %v1398 = vrot.slane %v1397, 1
    %v1399 = vadd.f32 %v1397, %v1398
    %v1400 = vsel %vm269, %v1348, 0.0
    %v1401 = vrot.slane %v1400, 4
    %v1402 = vadd.f32 %v1400, %v1401
    %v1403 = vrot.slane %v1402, 2
    %v1404 = vadd.f32 %v1402, %v1403
    %v1405 = vrot.slane %v1404, 1
    %v1406 = vadd.f32 %v1404, %v1405
    %v1407 = vsel %vm269, %v1349, 0.0
    %v1408 = vrot.slane %v1407, 4
    %v1409 = vadd.f32 %v1407, %v1408
    %v1410 = vrot.slane %v1409, 2
    %v1411 = vadd.f32 %v1409, %v1410
    %v1412 = vrot.slane %v1411, 1
    %v1413 = vadd.f32 %v1411, %v1412
    %v1414 = vsel %vm269, %v1350, 0.0
    %v1415 = vrot.slane %v1414, 4
    %v1416 = vadd.f32 %v1414, %v1415
    %v1417 = vrot.slane %v1416, 2
    %v1418 = vadd.f32 %v1416, %v1417
    %v1419 = vrot.slane %v1418, 1
    %v1420 = vadd.f32 %v1418, %v1419
    %v1421 = vsel %vm269, %v1351, 0.0
    %v1422 = vrot.slane %v1421, 4
    %v1423 = vadd.f32 %v1421, %v1422
    %v1424 = vrot.slane %v1423, 2
    %v1425 = vadd.f32 %v1423, %v1424
    %v1426 = vrot.slane %v1425, 1
    %v1427 = vadd.f32 %v1425, %v1426
    %v1428 = vsel %vm269, %v1352, 0.0
    %v1429 = vrot.slane %v1428, 4
    %v1430 = vadd.f32 %v1428, %v1429
    %v1431 = vrot.slane %v1430, 2
    %v1432 = vadd.f32 %v1430, %v1431
    %v1433 = vrot.slane %v1432, 1
    %v1434 = vadd.f32 %v1432, %v1433
    %v1435 = vsel %vm269, %v1353, 0.0
    %v1436 = vrot.slane %v1435, 4
    %v1437 = vadd.f32 %v1435, %v1436
    %v1438 = vrot.slane %v1437, 2
    %v1439 = vadd.f32 %v1437, %v1438
    %v1440 = vrot.slane %v1439, 1
    %v1441 = vadd.f32 %v1439, %v1440
    %v1442 = vsel %vm269, %v1354, 0.0
    %v1443 = vrot.slane %v1442, 4
    %v1444 = vadd.f32 %v1442, %v1443
    %v1445 = vrot.slane %v1444, 2
    %v1446 = vadd.f32 %v1444, %v1445
    %v1447 = vrot.slane %v1446, 1
    %v1448 = vadd.f32 %v1446, %v1447
    %v1449 = vsel %vm269, %v1355, 0.0
    %v1450 = vrot.slane %v1449, 4
    %v1451 = vadd.f32 %v1449, %v1450
    %v1452 = vrot.slane %v1451, 2
    %v1453 = vadd.f32 %v1451, %v1452
    %v1454 = vrot.slane %v1453, 1
    %v1455 = vadd.f32 %v1453, %v1454
    %v1456 = vsel %vm269, %v1356, 0.0
    %v1457 = vrot.slane %v1456, 4
    %v1458 = vadd.f32 %v1456, %v1457
    %v1459 = vrot.slane %v1458, 2
    %v1460 = vadd.f32 %v1458, %v1459
    %v1461 = vrot.slane %v1460, 1
    %v1462 = vadd.f32 %v1460, %v1461
    %v1463 = vsel %vm269, %v1357, 0.0
    %v1464 = vrot.slane %v1463, 4
    %v1465 = vadd.f32 %v1463, %v1464
    %v1466 = vrot.slane %v1465, 2
    %v1467 = vadd.f32 %v1465, %v1466
    %v1468 = vrot.slane %v1467, 1
    %v1469 = vadd.f32 %v1467, %v1468
    %v1486 = vsel %vm411, %v1371, %v1364
    %v1487 = vsel %vm414, %v1378, %v1486
    %v1488 = vsel %vm417, %v1385, %v1487
    %v1489 = vsel %vm420, %v1392, %v1488
    %v1490 = vsel %vm423, %v1399, %v1489
    %v1491 = vsel %vm426, %v1406, %v1490
    %v1492 = vsel %vm428, %v1413, %v1491
    %v1493 = vsel %vm411, %v1427, %v1420
    %v1494 = vsel %vm414, %v1434, %v1493
    %v1495 = vsel %vm417, %v1441, %v1494
    %v1496 = vsel %vm420, %v1448, %v1495
    %v1497 = vsel %vm423, %v1455, %v1496
    %v1498 = vsel %vm426, %v1462, %v1497
    %v1499 = vsel %vm428, %v1469, %v1498
    %1500 = vrot.lane.b32.xlu0 %v1492, 32
    %v1501 = vpop.permute.xlu0 %1500
    %1502 = vrot.lane.b32.xlu0 %v1499, 32
    %v1503 = vpop.permute.xlu0 %1502
    %v1506 = vsel %vm269, %v208, %v1501
    %v1507 = vsel %vm269, %v209, %v1503
    %v1508 = vld [vmem:[%s11] sm:$0xf]
    %v1509 = vld [vmem:[%s11 + $0x4] sm:$0xf]
    %v1510 = vld [vmem:[%s11 + $0x8] sm:$0xf]
    %v1511 = vld [vmem:[%s11 + $0xc] sm:$0xf]
    %v1512 = vld [vmem:[%s11 + $0x10] sm:$0xf]
    %v1513 = vld [vmem:[%s11 + $0x14] sm:$0xf]
    %v1514 = vld [vmem:[%s11 + $0x18] sm:$0xf]
    %v1515 = vld [vmem:[%s11 + $0x1c] sm:$0xf]
    %v1516 = vpack.c.bf16 %v1507, %v1506
    %v1517 = vld [vmem:[#allocation16] sm:$0x1]
    %v1519 = vlaneseq
    %v1520 = vshrl.u32 %v1519, 7
    %v1521 = vsub.s32 0, %v1520
    %v1522 = vrot.slane %v1517, %v1521
    %v1532 = vunpack.c.l.b16 %v1508
    %v1533 = vunpack.c.l.b16 %v1509
    %v1534 = vunpack.c.l.b16 %v1510
    %v1535 = vunpack.c.l.b16 %v1511
    %v1536 = vunpack.c.l.b16 %v1512
    %v1537 = vunpack.c.l.b16 %v1513
    %v1538 = vunpack.c.l.b16 %v1514
    %v1539 = vunpack.c.l.b16 %v1515
    %v1540 = vpack.c.b16 %v1533, %v1532
    %v1541 = vpack.c.b16 %v1535, %v1534
    %v1542 = vpack.c.b16 %v1537, %v1536
    %v1543 = vpack.c.b16 %v1539, %v1538
    %v1549 = vsel %vm312, %v1516, 0
    %1551 = vmatprep.subr.bf16.mxu0 0
    %1552 = vmatpush1.bf16.msra.mxu0 %v1540
    %1553 = vmatprep.subr.bf16.mxu0 0
    %1554 = vmatpush1.bf16.msra.mxu0 %v1541
    %1555 = vmatprep.subr.bf16.mxu0 0
    %1556 = vmatpush1.bf16.msra.mxu0 %v1542
    %1557 = vmatprep.subr.bf16.mxu0 0
    %1558 = vmatpush1.bf16.msra.mxu0 %v1543
    %1559 = vmatprep.subr.bf16.mxu0 0
    %1560 = vmatpush1.bf16.msra.mxu0 0
    %1561 = vmatprep.subr.bf16.mxu0 0
    %1562 = vmatpush1.bf16.msra.mxu0 0
    %1563 = vmatprep.subr.bf16.mxu0 0
    %1564 = vmatpush1.bf16.msra.mxu0 0
    %1565 = vmatprep.subr.bf16.mxu0 0
    %1566 = vmatpush1.bf16.msra.mxu0 0
    %1567 = vmatprep.subr.bf16.mxu0 0
    %1568 = vmatpush1.bf16.msra.mxu0 0
    %1569 = vmatprep.subr.bf16.mxu0 0
    %1570 = vmatpush1.bf16.msra.mxu0 0
    %1571 = vmatprep.subr.bf16.mxu0 0
    %1572 = vmatpush1.bf16.msra.mxu0 0
    %1573 = vmatprep.subr.bf16.mxu0 0
    %1574 = vmatpush1.bf16.msra.mxu0 0
    %1575 = vmatprep.subr.bf16.mxu0 0
    %1576 = vmatpush1.bf16.msra.mxu0 0
    %1577 = vmatprep.subr.bf16.mxu0 0
    %1578 = vmatpush1.bf16.msra.mxu0 0
    %1579 = vmatprep.subr.bf16.mxu0 0
    %1580 = vmatpush1.bf16.msra.mxu0 0
    %1581 = vmatprep.subr.bf16.mxu0 0
    %1582 = vmatpush1.bf16.msra.mxu0 0
    %1583 = vmatprep.mubr.bf16.mxu0 0
    %1584 = vmatmul.mubr.bf16.gmra.mrb[0].mxu0 %v1549
    %v1585 = vpop.f32.mrb[0].mxu0
    %v1586 = vadd.f32 %v1522, %v1585
    %v1587 = vpop.f32.mrb[0].mxu0
    %v1588 = vpop.f32.mrb[0].mxu0
    %v1589 = vadd.f32 %v1522, %v1588
    %v1590 = vpop.f32.mrb[0].mxu0
    %1591 = vdwg.mxu0
    %v1592 = vld [vmem:[%s12] sm:$0xf]
    %v1593 = vld [vmem:[%s12 + $0x4] sm:$0xf]
    %v1594 = vld [vmem:[%s12 + $0x8] sm:$0xf]
    %v1595 = vld [vmem:[%s12 + $0xc] sm:$0xf]
    %v1596 = vpack.c.bf16 %v233, %v232
    %v1597 = vpack.c.bf16 %v236, %v235
    %v1602 = vunpack.c.l.b16 %v1592
    %v1603 = vunpack.c.l.b16 %v1593
    %v1604 = vunpack.c.l.b16 %v1594
    %v1605 = vunpack.c.l.b16 %v1595
    %v1606 = vpack.c.b16 %v1603, %v1602
    %v1607 = vpack.c.b16 %v1605, %v1604
    %v1611 = vsel %vm269, %v1596, 0
    %v1614 = vsel %vm269, %v1597, 0
    %1616 = vmatprep.subr.bf16.mxu0 0
    %1617 = vmatpush1.bf16.msra.mxu0 %v1606
    %1618 = vmatprep.subr.bf16.mxu0 0
    %1619 = vmatpush1.bf16.msra.mxu0 %v1607
    %1620 = vmatprep.subr.bf16.mxu0 0
    %1621 = vmatpush1.bf16.msra.mxu0 0
    %1622 = vmatprep.subr.bf16.mxu0 0
    %1623 = vmatpush1.bf16.msra.mxu0 0
    %1624 = vmatprep.subr.bf16.mxu0 0
    %1625 = vmatpush1.bf16.msra.mxu0 0
    %1626 = vmatprep.subr.bf16.mxu0 0
    %1627 = vmatpush1.bf16.msra.mxu0 0
    %1628 = vmatprep.subr.bf16.mxu0 0
    %1629 = vmatpush1.bf16.msra.mxu0 0
    %1630 = vmatprep.subr.bf16.mxu0 0
    %1631 = vmatpush1.bf16.msra.mxu0 0
    %1632 = vmatprep.subr.bf16.mxu0 0
    %1633 = vmatpush1.bf16.msra.mxu0 0
    %1634 = vmatprep.subr.bf16.mxu0 0
    %1635 = vmatpush1.bf16.msra.mxu0 0
    %1636 = vmatprep.subr.bf16.mxu0 0
    %1637 = vmatpush1.bf16.msra.mxu0 0
    %1638 = vmatprep.subr.bf16.mxu0 0
    %1639 = vmatpush1.bf16.msra.mxu0 0
    %1640 = vmatprep.subr.bf16.mxu0 0
    %1641 = vmatpush1.bf16.msra.mxu0 0
    %1642 = vmatprep.subr.bf16.mxu0 0
    %1643 = vmatpush1.bf16.msra.mxu0 0
    %1644 = vmatprep.subr.bf16.mxu0 0
    %1645 = vmatpush1.bf16.msra.mxu0 0
    %1646 = vmatprep.subr.bf16.mxu0 0
    %1647 = vmatpush1.bf16.msra.mxu0 0
    %1648 = vmatprep.mubr.bf16.mxu0 0
    %1649 = vmatmul.mubr.bf16.gmra.mrb[0].mxu0 %v1611
    %v1650 = vpop.f32.mrb[0].mxu0
    %v1651 = vadd.f32 0.0, %v1650
    %v1652 = vpop.f32.mrb[0].mxu0
    %v1653 = vpop.f32.mrb[0].mxu0
    %v1654 = vadd.f32 0.0, %v1653
    %v1655 = vpop.f32.mrb[0].mxu0
    %1656 = vmatprep.mubr.bf16.mxu0 0
    %1657 = vmatmul.mubr.bf16.gmra.mrb[0].mxu0 %v1614
    %v1658 = vpop.f32.mrb[0].mxu0
    %v1659 = vadd.f32 0.0, %v1658
    %v1660 = vpop.f32.mrb[0].mxu0
    %v1661 = vpop.f32.mrb[0].mxu0
    %v1662 = vadd.f32 0.0, %v1661
    %v1663 = vpop.f32.mrb[0].mxu0
    %1664 = vdwg.mxu0
    %v1665 = vld [vmem:[#allocation17] sm:$0x1]
    %v1666 = vadd.f32 %v1586, %v1651
    %v1667 = vadd.f32 %v1589, %v1654
    %v1668 = vadd.f32 %v1586, %v1659
    %v1669 = vadd.f32 %v1589, %v1662
    %v1670 = vxor.u32 %v1666, 2147483648
    %v1671 = vxor.u32 %v1667, 2147483648
    %v1672 = vxor.u32 %v1668, 2147483648
    %v1673 = vxor.u32 %v1669, 2147483648
    %v1674 = vmul.f32 %v1670, 1.442695
    %v1675 = vpow.pop %v1674
    %v1676 = vmul.f32 %v1671, 1.442695
    %v1677 = vpow.pop %v1676
    %v1678 = vmul.f32 %v1672, 1.442695
    %v1679 = vpow.pop %v1678
    %v1680 = vmul.f32 %v1673, 1.442695
    %v1681 = vpow.pop %v1680
    %v1682 = vadd.f32 %v1675, 1.0
    %v1683 = vadd.f32 %v1677, 1.0
    %v1684 = vadd.f32 %v1679, 1.0
    %v1685 = vadd.f32 %v1681, 1.0
    %v1686 = vrcp.pop %v1682
    %v1687 = vmul.f32 1.0, %v1686
    %v1688 = vrcp.pop %v1683
    %v1689 = vmul.f32 1.0, %v1688
    %v1690 = vrcp.pop %v1684
    %v1691 = vmul.f32 1.0, %v1690
    %v1692 = vrcp.pop %v1685
    %v1693 = vmul.f32 1.0, %v1692
    %v1695 = vlaneseq
    %v1696 = vshrl.u32 %v1695, 7
    %v1697 = vsub.s32 0, %v1696
    %v1698 = vrot.slane %v1665, %v1697
    %1699 = vrot.lane.b32.xlu0 %v1698, 64
    %v1700 = vpop.permute.xlu0 %1699
    %v1702 = vadd.f32 %v1651, %v1700
    %v1703 = vadd.f32 %v1654, %v1700
    %v1704 = vadd.f32 %v1659, %v1700
    %v1705 = vadd.f32 %v1662, %v1700
    %1710 = vrot.lane.b32.xlu0 %v1702, 64
    %v1711 = vpop.permute.xlu0 %1710
    %1712 = vrot.lane.b32.xlu0 %v1703, 64
    %v1713 = vpop.permute.xlu0 %1712
    %1714 = vrot.lane.b32.xlu0 %v1704, 64
    %v1715 = vpop.permute.xlu0 %1714
    %1716 = vrot.lane.b32.xlu0 %v1705, 64
    %v1717 = vpop.permute.xlu0 %1716
    %v1722 = vmul.f32 %v1687, %v1711
    %v1723 = vmul.f32 %v1689, %v1713
    %v1724 = vmul.f32 %v1691, %v1715
    %v1725 = vmul.f32 %v1693, %v1717
    %1730 = vrot.lane.b32.xlu0 %v1722, 64
    %v1731 = vpop.permute.xlu0 %1730
    %1732 = vrot.lane.b32.xlu0 %v1723, 64
    %v1733 = vpop.permute.xlu0 %1732
    %1734 = vrot.lane.b32.xlu0 %v1724, 64
    %v1735 = vpop.permute.xlu0 %1734
    %1736 = vrot.lane.b32.xlu0 %v1725, 64
    %v1737 = vpop.permute.xlu0 %1736
    %v1742 = vadd.f32 %v1586, %v1731
    %v1743 = vadd.f32 %v1589, %v1733
    %v1744 = vadd.f32 %v1586, %v1735
    %v1745 = vadd.f32 %v1589, %v1737
    %v1746 = vtanh.pop %v1742
    %v1747 = vtanh.pop %v1743
    %v1748 = vtanh.pop %v1744
    %v1749 = vtanh.pop %v1745
    %v1750 = vsub.f32 1.0, %v1687
    %v1751 = vsub.f32 1.0, %v1689
    %v1752 = vsub.f32 1.0, %v1691
    %v1753 = vsub.f32 1.0, %v1693
    %1758 = vrot.lane.b32.xlu0 %v1746, 96
    %v1759 = vpop.permute.xlu0 %1758
    %1760 = vrot.lane.b32.xlu0 %v1747, 96
    %v1761 = vpop.permute.xlu0 %1760
    %1762 = vrot.lane.b32.xlu0 %v1748, 96
    %v1763 = vpop.permute.xlu0 %1762
    %1764 = vrot.lane.b32.xlu0 %v1749, 96
    %v1765 = vpop.permute.xlu0 %1764
    %v1770 = vmul.f32 %v1750, %v1759
    %v1771 = vmul.f32 %v1751, %v1761
    %v1772 = vmul.f32 %v1752, %v1763
    %v1773 = vmul.f32 %v1753, %v1765
    %1778 = vrot.lane.b32.xlu0 %v232, 32
    %v1779 = vpop.permute.xlu0 %1778
    %1780 = vrot.lane.b32.xlu0 %v233, 32
    %v1781 = vpop.permute.xlu0 %1780
    %1782 = vrot.lane.b32.xlu0 %v235, 32
    %v1783 = vpop.permute.xlu0 %1782
    %1784 = vrot.lane.b32.xlu0 %v236, 32
    %v1785 = vpop.permute.xlu0 %1784
    %v1790 = vmul.f32 %v1687, %v1779
    %v1791 = vmul.f32 %v1689, %v1781
    %v1792 = vmul.f32 %v1691, %v1783
    %v1793 = vmul.f32 %v1693, %v1785
    %v1794 = vadd.f32 %v1770, %v1790
    %v1795 = vadd.f32 %v1771, %v1791
    %v1796 = vadd.f32 %v1772, %v1792
    %v1797 = vadd.f32 %v1773, %v1793
    %1800 = vrot.lane.b32.xlu0 %v210, 127
    %v1801 = vpop.permute.xlu0 %1800
    %1802 = vrot.lane.b32.xlu0 %v211, 127
    %v1803 = vpop.permute.xlu0 %1802
    %v1806 = vsub.f32 1.0, %v210
    %v1807 = vsub.f32 1.0, %v211
    %v1808 = vsub.f32 1.0, %v1801
    %v1809 = vsub.f32 1.0, %v1803
    %1811 = vset.pattern.permute.xlu0 0
    %1812 = vperm.xlu0 %1811, %v1806
    %v1813 = vpop.permute.xlu0 %1812
    %1816 = vset.pattern.permute.xlu0 0
    %1817 = vperm.xlu0 %1816, %v1807
    %v1818 = vpop.permute.xlu0 %1817
    %1821 = vset.pattern.permute.xlu0 0
    %1822 = vperm.xlu0 %1821, %v1808
    %v1823 = vpop.permute.xlu0 %1822
    %1826 = vset.pattern.permute.xlu0 0
    %1827 = vperm.xlu0 %1826, %v1809
    %v1828 = vpop.permute.xlu0 %1827
    %v1830 = vmul.f32 %v232, %v1813
    %v1831 = vmul.f32 %v233, %v1818
    %v1832 = vmul.f32 %v235, %v1823
    %v1833 = vmul.f32 %v236, %v1828
    %1834 = vset.pattern.permute.xlu0 0
    %1835 = vperm.xlu0 %1834, %v210
    %v1836 = vpop.permute.xlu0 %1835
    %1838 = vset.pattern.permute.xlu0 0
    %1839 = vperm.xlu0 %1838, %v211
    %v1840 = vpop.permute.xlu0 %1839
    %1842 = vset.pattern.permute.xlu0 0
    %1843 = vperm.xlu0 %1842, %v1801
    %v1844 = vpop.permute.xlu0 %1843
    %1846 = vset.pattern.permute.xlu0 0
    %1847 = vperm.xlu0 %1846, %v1803
    %v1848 = vpop.permute.xlu0 %1847
    %v1850 = vmul.f32 %v1794, %v1836
    %v1851 = vmul.f32 %v1795, %v1840
    %v1852 = vmul.f32 %v1796, %v1844
    %v1853 = vmul.f32 %v1797, %v1848
    %1858 = vrot.lane.b32.xlu0 %v1850, 96
    %v1859 = vpop.permute.xlu0 %1858
    %1860 = vrot.lane.b32.xlu0 %v1851, 96
    %v1861 = vpop.permute.xlu0 %1860
    %1862 = vrot.lane.b32.xlu0 %v1852, 96
    %v1863 = vpop.permute.xlu0 %1862
    %1864 = vrot.lane.b32.xlu0 %v1853, 96
    %v1865 = vpop.permute.xlu0 %1864
    %v1870 = vadd.f32 %v1830, %v1859
    %v1871 = vadd.f32 %v1831, %v1861
    %v1872 = vadd.f32 %v1832, %v1863
    %v1873 = vadd.f32 %v1833, %v1865
    %1874 = vst.msk [vmem:[#allocation21] sm:$0xff] %vm269, %v1870
    %1875 = vst.msk [vmem:[#allocation21 + $0x8] sm:$0xff] %vm269, %v1871
    %1876 = vst.msk [vmem:[#allocation21 + $0x10] sm:$0xff] %vm269, %v1872
    %1877 = vst.msk [vmem:[#allocation21 + $0x18] sm:$0xff] %vm269, %v1873
    %v1878 = vmul.f32 %v1870, %v240
    %v1879 = vmul.f32 %v1871, %v245
    %v1880 = vmul.f32 %v1872, %v251
    %v1881 = vmul.f32 %v1873, %v255
    %v1882 = vadd.f32 %v1878, %v1880
    %v1883 = vadd.f32 %v1879, %v1881
    %v1884 = vld [vmem:[#allocation19] sm:$0xf]
    %v1885 = vld [vmem:[#allocation19 + $0x4] sm:$0xf]
    %v1886 = vld [vmem:[#allocation19 + $0x8] sm:$0xf]
    %v1887 = vld [vmem:[#allocation19 + $0xc] sm:$0xf]
    %v1888 = vpack.c.bf16 %v1883, %v1882
    %v1889 = vld [vmem:[%s17] sm:$0x1]
    %v1891 = vlaneseq
    %v1892 = vshrl.u32 %v1891, 7
    %v1893 = vsub.s32 0, %v1892
    %v1894 = vrot.slane %v1889, %v1893
    %v1900 = vunpack.c.l.b16 %v1884
    %v1901 = vunpack.c.l.b16 %v1885
    %v1902 = vunpack.c.l.b16 %v1886
    %v1903 = vunpack.c.l.b16 %v1887
    %v1904 = vpack.c.b16 %v1901, %v1900
    %v1905 = vpack.c.b16 %v1903, %v1902
    %v1909 = vsel %vm269, %v1888, 0
    %1911 = vmatprep.subr.bf16.mxu0 0
    %1912 = vmatpush1.bf16.msra.mxu0 %v1904
    %1913 = vmatprep.subr.bf16.mxu0 0
    %1914 = vmatpush1.bf16.msra.mxu0 %v1905
    %1915 = vmatprep.subr.bf16.mxu0 0
    %1916 = vmatpush1.bf16.msra.mxu0 0
    %1917 = vmatprep.subr.bf16.mxu0 0
    %1918 = vmatpush1.bf16.msra.mxu0 0
    %1919 = vmatprep.subr.bf16.mxu0 0
    %1920 = vmatpush1.bf16.msra.mxu0 0
    %1921 = vmatprep.subr.bf16.mxu0 0
    %1922 = vmatpush1.bf16.msra.mxu0 0
    %1923 = vmatprep.subr.bf16.mxu0 0
    %1924 = vmatpush1.bf16.msra.mxu0 0
    %1925 = vmatprep.subr.bf16.mxu0 0
    %1926 = vmatpush1.bf16.msra.mxu0 0
    %1927 = vmatprep.subr.bf16.mxu0 0
    %1928 = vmatpush1.bf16.msra.mxu0 0
    %1929 = vmatprep.subr.bf16.mxu0 0
    %1930 = vmatpush1.bf16.msra.mxu0 0
    %1931 = vmatprep.subr.bf16.mxu0 0
    %1932 = vmatpush1.bf16.msra.mxu0 0
    %1933 = vmatprep.subr.bf16.mxu0 0
    %1934 = vmatpush1.bf16.msra.mxu0 0
    %1935 = vmatprep.subr.bf16.mxu0 0
    %1936 = vmatpush1.bf16.msra.mxu0 0
    %1937 = vmatprep.subr.bf16.mxu0 0
    %1938 = vmatpush1.bf16.msra.mxu0 0
    %1939 = vmatprep.subr.bf16.mxu0 0
    %1940 = vmatpush1.bf16.msra.mxu0 0
    %1941 = vmatprep.subr.bf16.mxu0 0
    %1942 = vmatpush1.bf16.msra.mxu0 0
    %1943 = vmatprep.mubr.bf16.mxu0 0
    %1944 = vmatmul.mubr.bf16.gmra.mrb[0].mxu0 %v1909
    %v1945 = vpop.f32.mrb[0].mxu0
    %v1946 = vadd.f32 %v1894, %v1945
    %v1947 = vpop.f32.mrb[0].mxu0
    %v1948 = vpop.f32.mrb[0].mxu0
    %v1949 = vadd.f32 %v1894, %v1948
    %v1950 = vpop.f32.mrb[0].mxu0
    %1951 = vdwg.mxu0
    %v1952 = vld [vmem:[%s16] sm:$0xf]
    %v1953 = vld [vmem:[%s16 + $0x4] sm:$0xf]
    %v1954 = vld [vmem:[%s16 + $0x8] sm:$0xf]
    %v1955 = vld [vmem:[%s16 + $0xc] sm:$0xf]
    %v1956 = vpack.c.bf16 %v231, %v230
    %v1961 = vunpack.c.l.b16 %v1952
    %v1962 = vunpack.c.l.b16 %v1953
    %v1963 = vunpack.c.l.b16 %v1954
    %v1964 = vunpack.c.l.b16 %v1955
    %v1965 = vpack.c.b16 %v1962, %v1961
    %v1966 = vpack.c.b16 %v1964, %v1963
    %v1970 = vsel %vm269, %v1956, 0
    %1972 = vmatprep.subr.bf16.mxu0 0
    %1973 = vmatpush1.bf16.msra.mxu0 %v1965
    %1974 = vmatprep.subr.bf16.mxu0 0
    %1975 = vmatpush1.bf16.msra.mxu0 %v1966
    %1976 = vmatprep.subr.bf16.mxu0 0
    %1977 = vmatpush1.bf16.msra.mxu0 0
    %1978 = vmatprep.subr.bf16.mxu0 0
    %1979 = vmatpush1.bf16.msra.mxu0 0
    %1980 = vmatprep.subr.bf16.mxu0 0
    %1981 = vmatpush1.bf16.msra.mxu0 0
    %1982 = vmatprep.subr.bf16.mxu0 0
    %1983 = vmatpush1.bf16.msra.mxu0 0
    %1984 = vmatprep.subr.bf16.mxu0 0
    %1985 = vmatpush1.bf16.msra.mxu0 0
    %1986 = vmatprep.subr.bf16.mxu0 0
    %1987 = vmatpush1.bf16.msra.mxu0 0
    %1988 = vmatprep.subr.bf16.mxu0 0
    %1989 = vmatpush1.bf16.msra.mxu0 0
    %1990 = vmatprep.subr.bf16.mxu0 0
    %1991 = vmatpush1.bf16.msra.mxu0 0
    %1992 = vmatprep.subr.bf16.mxu0 0
    %1993 = vmatpush1.bf16.msra.mxu0 0
    %1994 = vmatprep.subr.bf16.mxu0 0
    %1995 = vmatpush1.bf16.msra.mxu0 0
    %1996 = vmatprep.subr.bf16.mxu0 0
    %1997 = vmatpush1.bf16.msra.mxu0 0
    %1998 = vmatprep.subr.bf16.mxu0 0
    %1999 = vmatpush1.bf16.msra.mxu0 0
    %2000 = vmatprep.subr.bf16.mxu0 0
    %2001 = vmatpush1.bf16.msra.mxu0 0
    %2002 = vmatprep.subr.bf16.mxu0 0
    %2003 = vmatpush1.bf16.msra.mxu0 0
    %2004 = vmatprep.mubr.bf16.mxu0 0
    %2005 = vmatmul.mubr.bf16.gmra.mrb[0].mxu0 %v1970
    %v2006 = vpop.f32.mrb[0].mxu0
    %v2007 = vadd.f32 0.0, %v2006
    %v2008 = vpop.f32.mrb[0].mxu0
    %v2009 = vpop.f32.mrb[0].mxu0
    %v2010 = vadd.f32 0.0, %v2009
    %v2011 = vpop.f32.mrb[0].mxu0
    %2012 = vdwg.mxu0
    %v2013 = vld [vmem:[%s18] sm:$0x1]
    %v2014 = vadd.f32 %v1946, %v2007
    %v2015 = vadd.f32 %v1949, %v2010
    %v2016 = vxor.u32 %v2014, 2147483648
    %v2017 = vxor.u32 %v2015, 2147483648
    %v2018 = vmul.f32 %v2016, 1.442695
    %v2019 = vpow.pop %v2018
    %v2020 = vmul.f32 %v2017, 1.442695
    %v2021 = vpow.pop %v2020
    %v2022 = vadd.f32 %v2019, 1.0
    %v2023 = vadd.f32 %v2021, 1.0
    %v2024 = vrcp.pop %v2022
    %v2025 = vmul.f32 1.0, %v2024
    %v2026 = vrcp.pop %v2023
    %v2027 = vmul.f32 1.0, %v2026
    %v2029 = vlaneseq
    %v2030 = vshrl.u32 %v2029, 7
    %v2031 = vsub.s32 0, %v2030
    %v2032 = vrot.slane %v2013, %v2031
    %2033 = vrot.lane.b32.xlu0 %v2032, 64
    %v2034 = vpop.permute.xlu0 %2033
    %v2036 = vadd.f32 %v2007, %v2034
    %v2037 = vadd.f32 %v2010, %v2034
    %2040 = vrot.lane.b32.xlu0 %v2036, 64
    %v2041 = vpop.permute.xlu0 %2040
    %2042 = vrot.lane.b32.xlu0 %v2037, 64
    %v2043 = vpop.permute.xlu0 %2042
    %v2046 = vmul.f32 %v2025, %v2041
    %v2047 = vmul.f32 %v2027, %v2043
    %2050 = vrot.lane.b32.xlu0 %v2046, 64
    %v2051 = vpop.permute.xlu0 %2050
    %2052 = vrot.lane.b32.xlu0 %v2047, 64
    %v2053 = vpop.permute.xlu0 %2052
    %v2056 = vadd.f32 %v1946, %v2051
    %v2057 = vadd.f32 %v1949, %v2053
    %v2058 = vtanh.pop %v2056
    %v2059 = vtanh.pop %v2057
    %v2060 = vsub.f32 1.0, %v2025
    %v2061 = vsub.f32 1.0, %v2027
    %2064 = vrot.lane.b32.xlu0 %v2058, 96
    %v2065 = vpop.permute.xlu0 %2064
    %2066 = vrot.lane.b32.xlu0 %v2059, 96
    %v2067 = vpop.permute.xlu0 %2066
    %v2070 = vmul.f32 %v2060, %v2065
    %v2071 = vmul.f32 %v2061, %v2067
    %2074 = vrot.lane.b32.xlu0 %v230, 32
    %v2075 = vpop.permute.xlu0 %2074
    %2076 = vrot.lane.b32.xlu0 %v231, 32
    %v2077 = vpop.permute.xlu0 %2076
    %v2080 = vmul.f32 %v2025, %v2075
    %v2081 = vmul.f32 %v2027, %v2077
    %v2082 = vadd.f32 %v2070, %v2080
    %v2083 = vadd.f32 %v2071, %v2081
    %2086 = vrot.lane.b32.xlu0 %v2082, 96
    %v2087 = vpop.permute.xlu0 %2086
    %2088 = vrot.lane.b32.xlu0 %v2083, 96
    %v2089 = vpop.permute.xlu0 %2088
    %2092 = vst.msk [vmem:[#allocation23] sm:$0xff] %vm269, %v2087
    %2093 = vst.msk [vmem:[#allocation23 + $0x8] sm:$0xff] %vm269, %v2089
    // Predicated region
    $region122: #{tpu_custom_call.1} parent=1 // pred_check
      _
    $region123: #{tpu_custom_call.1} parent=1 // pred_check_branch
      %2095 = sbr.rel (0) target = $region125
    $region124: #{tpu_custom_call.1} parent=1 // pred_region
      %s2097 = ssub.s32 256, 256
      %2098 = vsyncadd [#allocation4], %s2097
      %s2099 = sshll.u32 [#allocation20], 4
      %s2100 = int_to_ptr.vmem [resolvable:$true] %s2099
      %2105 = dma.vmem_to_hbm [thread:$0]  %s2100, 256, %s19, [#allocation4], 128, 128, 8
    $region125: #{tpu_custom_call.1} parent=1 // pred_fallthru
      _
    // Predicated region
    $region126: #{tpu_custom_call.1} parent=1 // pred_check
      _
    $region127: #{tpu_custom_call.1} parent=1 // pred_check_branch
      %2107 = sbr.rel (0) target = $region129
    $region128: #{tpu_custom_call.1} parent=1 // pred_region
      %s2109 = ssub.s32 512, 512
      %2110 = vsyncadd [#allocation22], %s2109
      %s2111 = sshll.u32 [#allocation21], 4
      %s2112 = int_to_ptr.vmem [resolvable:$true] %s2111
      %2117 = dma.vmem_to_hbm [thread:$0]  %s2112, 512, %s20, [#allocation22], 128, 128, 8
    $region129: #{tpu_custom_call.1} parent=1 // pred_fallthru
      _
    // Predicated region
    $region130: #{tpu_custom_call.1} parent=1 // pred_check
      _
    $region131: #{tpu_custom_call.1} parent=1 // pred_check_branch
      %2119 = sbr.rel (0) target = $region133
    $region132: #{tpu_custom_call.1} parent=1 // pred_region
      %s2121 = ssub.s32 256, 256
      %2122 = vsyncadd [#allocation22], %s2121
      %s2123 = sshll.u32 [#allocation23], 4
      %s2124 = int_to_ptr.vmem [resolvable:$true] %s2123
      %2129 = dma.vmem_to_hbm [thread:$0]  %s2124, 256, %s21, [#allocation22], 128, 128, 8
    $region133: #{tpu_custom_call.1} parent=1 // pred_fallthru
      _
    // Predicated region
    $region134: #{tpu_custom_call.1} parent=1 // pred_check
      _
    $region135: #{tpu_custom_call.1} parent=1 // pred_check_branch
      %2131 = sbr.rel (0) target = $region137
    $region136: #{tpu_custom_call.1} parent=1 // pred_region
      _
    $region137: #{tpu_custom_call.1} parent=1 // pred_fallthru
      _
    // Predicated region
    $region138: #{tpu_custom_call.1} parent=1 // pred_check
      _
    $region139: #{tpu_custom_call.1} parent=1 // pred_check_branch
      %2133 = sbr.rel (0) target = $region141
    $region140: #{tpu_custom_call.1} parent=1 // pred_region
      %2134 = dma.done [#allocation4], 256
    $region141: #{tpu_custom_call.1} parent=1 // pred_fallthru
      _
    // Predicated region
    $region142: #{tpu_custom_call.1} parent=1 // pred_check
      _
    $region143: #{tpu_custom_call.1} parent=1 // pred_check_branch
      %2136 = sbr.rel (0) target = $region145
    $region144: #{tpu_custom_call.1} parent=1 // pred_region
      %2137 = dma.done [#allocation22], 512
    $region145: #{tpu_custom_call.1} parent=1 // pred_fallthru
      _
    // Predicated region
    $region146: #{tpu_custom_call.1} parent=1 // pred_check
      _
    $region147: #{tpu_custom_call.1} parent=1 // pred_check_branch
      %2139 = sbr.rel (0) target = $region149
    $region148: #{tpu_custom_call.1} parent=1 // pred_region
      %2140 = dma.done [#allocation22], 256
    $region149: #{tpu_custom_call.1} parent=1 // pred_fallthru
      _
    // Predicated region
    $region150: #{tpu_custom_call.1} parent=1 // pred_check
      _
    $region151: #{tpu_custom_call.1} parent=1 // pred_check_branch
      %2142 = sbr.rel (0) target = $region153
    $region152: #{tpu_custom_call.1} parent=1 // pred_region
      _
    $region153: #{tpu_custom_call.1} parent=1 // pred_fallthru
      _
    %2143 = vsyncpa [#allocation3], 1
    %2144 = vsyncpa [#allocation6], 1
    %2145 = vsyncpa [#allocation9], 1
    %2146 = vsyncpa [#allocation12], 1
    %2147 = vsyncpa [#allocation15], 1
    %2148 = vsyncpa [#allocation18], 1
    %2149 = vsyncpa [#allocation4], 1
    %2150 = vsyncpa [#allocation22], 1

</llo_original>
